<compile_context>
chip_gen: v7x
topology: tpu7x:2x2x1
jax: 0.10.0
libtpu: 0.0.40
codegen_flags: <defaults>
</compile_context>

<pallas_src>
import functools

import jax
import jax.numpy as jnp
from jax import lax
from jax.experimental import pallas as pl
from jax.experimental.pallas import tpu as pltpu


# -----------------------------------------------------------------------------
# Fused BYOL forward kernel (single grid step)
# -----------------------------------------------------------------------------

def _byol_fused_kernel(B, HW,
                       patch_ref,
                       conv_w_ref, conv_b_ref,
                       pw1, pb1, pg, pbe, pw2, pb2,
                       qw1, qb1, qg, qbe, qw2, qb2,
                       loss_ref):
    twoB = 2 * B
    inv_hw = 1.0 / HW          # applied in f32 AFTER the reduction (exactness)
    inv_b = 1.0 / B

    # ---- conv stem: (2B*HW, 9*Cin) @ (9*Cin, Cout), bf16 in / f32 accumulate ----
    # K = 27 underfills the MXU contraction; at this size the step is overhead-
    # bound anyway, so we do not tile it further.
    feat = jnp.dot(patch_ref[...], conv_w_ref[...],
                   preferred_element_type=jnp.float32)
    feat = jnp.maximum(feat + conv_b_ref[...], 0.0)            # (2B*HW, Cout) f32

    # ---- global average pool: in-kernel f32 reduction (no pooling matrix) ----
    cout = feat.shape[-1]
    rep = jnp.sum(feat.reshape(twoB, HW, cout), axis=1) * inv_hw   # (2B, Cout) f32
    # rows: [view1_b0 ... view1_b{B-1}, view2_b0 ... view2_b{B-1}]

    def mlp(x, w1, b1, g, be, w2, b2):
        h = jnp.dot(x.astype(jnp.bfloat16), w1[...],
                    preferred_element_type=jnp.float32) + b1[...]
        # BatchNorm1d with training batch stats computed PER VIEW (rows [0,B) and
        # [B,2B)), matching two separate PyTorch forward calls. Masked f32 column
        # reductions -- no MXU op, no precision loss in the 1/B scale.
        m1 = (lax.broadcasted_iota(jnp.int32, h.shape, 0) < B).astype(jnp.float32)
        m2 = 1.0 - m1
        mu1 = jnp.sum(h * m1, axis=0, keepdims=True) * inv_b
        mu2 = jnp.sum(h * m2, axis=0, keepdims=True) * inv_b
        mu = m1 * mu1 + m2 * mu2
        c = h - mu
        v1 = jnp.sum(c * c * m1, axis=0, keepdims=True) * inv_b
        v2 = jnp.sum(c * c * m2, axis=0, keepdims=True) * inv_b
        var = m1 * v1 + m2 * v2
        hn = c * lax.rsqrt(var + 1e-5) * g[...] + be[...]
        hn = jnp.maximum(hn, 0.0)
        return jnp.dot(hn.astype(jnp.bfloat16), w2[...],
                       preferred_element_type=jnp.float32) + b2[...]

    proj = mlp(rep, pw1, pb1, pg, pbe, pw2, pb2)    # online projections (2B, D)
    pred = mlp(proj, qw1, qb1, qg, qbe, qw2, qb2)   # online predictions (2B, D)

    # Target encoder is a deep copy of the online encoder at init, so its
    # projections are bit-identical -> reuse (forward-only, stop-grad implicit).
    # TODO(synk): once EMA target weights diverge from the online weights, thread
    #             them in as extra params and evaluate a second projector here.
    tgt = proj

    def l2norm(v):
        ss = jnp.sum(v * v, axis=-1, keepdims=True)
        return v * lax.rsqrt(jnp.maximum(ss, 1e-24))

    pn = l2norm(pred)                                # (2B, D) f32
    tn = l2norm(tgt)                                 # (2B, D) f32

    # Cross-view pairing without a permutation matrix or roll:
    #   gram[i, j] = <pn_i, tn_j>; keep only the (i, (i+B) mod 2B) entries.
    gram = lax.dot_general(pn, tn, (((1,), (1,)), ((), ())),
                           preferred_element_type=jnp.float32)   # (2B, 2B)
    rows = lax.broadcasted_iota(jnp.int32, (twoB, twoB), 0)
    cols = lax.broadcasted_iota(jnp.int32, (twoB, twoB), 1)
    pair = cols == ((rows + B) % twoB)
    dots = jnp.sum(jnp.where(pair, gram, 0.0), axis=-1, keepdims=True)   # (2B, 1)
    per_row = 2.0 - 2.0 * dots
    # torch: (loss_one + loss_two).mean() == sum over all 2B rows / B
    loss_ref[...] = jnp.sum(per_row, axis=0, keepdims=True) * inv_b


def byol_fused_pallas(patches, params, batch, hw):
    pj, pr = params["projector"], params["predictor"]

    def full(arr):  # full-array resident block (single grid step)
        nd = arr.ndim
        return pl.BlockSpec(arr.shape, lambda i, _nd=nd: (0,) * _nd)

    grid_spec = pltpu.PrefetchScalarGridSpec(
        num_scalar_prefetch=0,
        grid=(1,),          # whole problem in one step: no pipeline overhead
        in_specs=[
            full(patches),
            full(params["conv_w"]), full(params["conv_b"]),
            full(pj["w1"]), full(pj["b1"]), full(pj["g"]), full(pj["be"]),
            full(pj["w2"]), full(pj["b2"]),
            full(pr["w1"]), full(pr["b1"]), full(pr["g"]), full(pr["be"]),
            full(pr["w2"]), full(pr["b2"]),
        ],
        out_specs=pl.BlockSpec((1, 1), lambda i: (0, 0)),
    )

    loss = pl.pallas_call(
        functools.partial(_byol_fused_kernel, batch, hw),
        out_shape=jax.ShapeDtypeStruct((1, 1), jnp.float32),
        grid_spec=grid_spec,
        compiler_params=pltpu.CompilerParams(
            dimension_semantics=("arbitrary",),
            vmem_limit_bytes=32 * 1024 * 1024,   # explicit cap; fine on v5e/v6e/v7x
        ),
    )(patches,
      params["conv_w"], params["conv_b"],
      pj["w1"], pj["b1"], pj["g"], pj["be"], pj["w2"], pj["b2"],
      pr["w1"], pr["b1"], pr["g"], pr["be"], pr["w2"], pr["b2"])
    return loss[0, 0]


# -----------------------------------------------------------------------------
# Glue (plain JAX): views, im2col, parameter init
# -----------------------------------------------------------------------------

_IMNET_MEAN = jnp.array([0.485, 0.456, 0.406], jnp.float32).reshape(1, 3, 1, 1)
_IMNET_STD = jnp.array([0.229, 0.224, 0.225], jnp.float32).reshape(1, 3, 1, 1)


def _normalize_img(x_nchw):
    return (x_nchw - _IMNET_MEAN) / _IMNET_STD


def _im2col_3x3(x_nhwc):
    # 3x3 patches, padding=1, stride=1 -> (N, H*W, 9*C)
    N, H, W, C = x_nhwc.shape
    xp = jnp.pad(x_nhwc, ((0, 0), (1, 1), (1, 1), (0, 0)))
    cols = [xp[:, dh:dh + H, dw:dw + W, :] for dh in range(3) for dw in range(3)]
    return jnp.concatenate(cols, axis=-1).reshape(N, H * W, 9 * C)


def init_params(key, cin=3, cout=128, proj_size=128, proj_hidden=128):
    # Feature dims are multiples of 128 (lane-dense) -> unmasked full-lane stores
    # and full MXU columns. Matmul weights stored bf16; biases / BN params f32.
    ks = jax.random.split(key, 3)

    def mlp_params(k, din, hidden, dout):
        k1, k2 = jax.random.split(k)
        return dict(
            w1=(jax.random.normal(k1, (din, hidden), jnp.float32)
                / jnp.sqrt(din)).astype(jnp.bfloat16),
            b1=jnp.zeros((1, hidden), jnp.float32),
            g=jnp.ones((1, hidden), jnp.float32),
            be=jnp.zeros((1, hidden), jnp.float32),
            w2=(jax.random.normal(k2, (hidden, dout), jnp.float32)
                / jnp.sqrt(hidden)).astype(jnp.bfloat16),
            b2=jnp.zeros((1, dout), jnp.float32),
        )

    return dict(
        conv_w=(jax.random.normal(ks[0], (9 * cin, cout), jnp.float32)
                / jnp.sqrt(9 * cin)).astype(jnp.bfloat16),
        conv_b=jnp.zeros((1, cout), jnp.float32),
        projector=mlp_params(ks[1], cout, proj_hidden, proj_size),
        predictor=mlp_params(ks[2], proj_size, proj_hidden, proj_size),
    )


def byol_forward(x_nchw, params):
    B, C, H, W = x_nchw.shape
    HW = H * W

    # two views (deterministic stand-ins for the random augment pipeline)
    view1 = _normalize_img(x_nchw)
    view2 = _normalize_img(jnp.flip(x_nchw, axis=-1))      # horizontal flip
    both = jnp.concatenate([view1, view2], axis=0)         # (2B, C, H, W)
    both = jnp.transpose(both, (0, 2, 3, 1))               # NHWC (channels on lanes)

    patches = _im2col_3x3(both).reshape(2 * B * HW, 9 * C).astype(jnp.bfloat16)
    return byol_fused_pallas(patches, params, batch=B, hw=HW)


# -----------------------------------------------------------------------------
# Main
# -----------------------------------------------------------------------------

if __name__ == "__main__":
    key = jax.random.PRNGKey(0)
    k_img, k_param = jax.random.split(key)

    # BYOL.__init__ probes forward(torch.randn(2, 3, image_size, image_size)); image_size=16.
    x = jax.random.normal(k_img, (2, 3, 16, 16), jnp.float32)
    params = init_params(k_param)

    loss = jax.jit(byol_forward)(x, params)
    loss = jax.block_until_ready(loss)
    assert loss.shape == () and bool(jnp.isfinite(loss))
    print("KERNEL_OK")
</pallas_src>

<mosaic_0001>
module attributes {stable_mosaic.version = 11 : i64} {
  func.func @_byol_fused_kernel(%arg0: i32, %arg1: memref<1024x27xbf16, #tpu.memory_space<vmem>>, %arg2: memref<27x128xbf16, #tpu.memory_space<vmem>>, %arg3: memref<1x128xf32, #tpu.memory_space<vmem>>, %arg4: memref<128x128xbf16, #tpu.memory_space<vmem>>, %arg5: memref<1x128xf32, #tpu.memory_space<vmem>>, %arg6: memref<1x128xf32, #tpu.memory_space<vmem>>, %arg7: memref<1x128xf32, #tpu.memory_space<vmem>>, %arg8: memref<128x128xbf16, #tpu.memory_space<vmem>>, %arg9: memref<1x128xf32, #tpu.memory_space<vmem>>, %arg10: memref<128x128xbf16, #tpu.memory_space<vmem>>, %arg11: memref<1x128xf32, #tpu.memory_space<vmem>>, %arg12: memref<1x128xf32, #tpu.memory_space<vmem>>, %arg13: memref<1x128xf32, #tpu.memory_space<vmem>>, %arg14: memref<128x128xbf16, #tpu.memory_space<vmem>>, %arg15: memref<1x128xf32, #tpu.memory_space<vmem>>, %arg16: memref<1x1xf32, #tpu.memory_space<vmem>>) attributes {dimension_semantics = [#tpu.dimension_semantics<arbitrary>], iteration_bounds = array<i64: 1>, scalar_prefetch = 0 : i64, scratch_operands = 0 : i64, tpu.core_type = #tpu.core_type<tc>, window_params = [{pipeline_mode = #tpu.pipeline_mode<synchronous>, transform_indices = @transform_0, window_bounds = array<i64: 1024, 27>}, {pipeline_mode = #tpu.pipeline_mode<synchronous>, transform_indices = @transform_1, window_bounds = array<i64: 27, 128>}, {pipeline_mode = #tpu.pipeline_mode<synchronous>, transform_indices = @transform_2, window_bounds = array<i64: 1, 128>}, {pipeline_mode = #tpu.pipeline_mode<synchronous>, transform_indices = @transform_3, window_bounds = array<i64: 128, 128>}, {pipeline_mode = #tpu.pipeline_mode<synchronous>, transform_indices = @transform_4, window_bounds = array<i64: 1, 128>}, {pipeline_mode = #tpu.pipeline_mode<synchronous>, transform_indices = @transform_5, window_bounds = array<i64: 1, 128>}, {pipeline_mode = #tpu.pipeline_mode<synchronous>, transform_indices = @transform_6, window_bounds = array<i64: 1, 128>}, {pipeline_mode = #tpu.pipeline_mode<synchronous>, transform_indices = @transform_7, window_bounds = array<i64: 128, 128>}, {pipeline_mode = #tpu.pipeline_mode<synchronous>, transform_indices = @transform_8, window_bounds = array<i64: 1, 128>}, {pipeline_mode = #tpu.pipeline_mode<synchronous>, transform_indices = @transform_9, window_bounds = array<i64: 128, 128>}, {pipeline_mode = #tpu.pipeline_mode<synchronous>, transform_indices = @transform_10, window_bounds = array<i64: 1, 128>}, {pipeline_mode = #tpu.pipeline_mode<synchronous>, transform_indices = @transform_11, window_bounds = array<i64: 1, 128>}, {pipeline_mode = #tpu.pipeline_mode<synchronous>, transform_indices = @transform_12, window_bounds = array<i64: 1, 128>}, {pipeline_mode = #tpu.pipeline_mode<synchronous>, transform_indices = @transform_13, window_bounds = array<i64: 128, 128>}, {pipeline_mode = #tpu.pipeline_mode<synchronous>, transform_indices = @transform_14, window_bounds = array<i64: 1, 128>}, {pipeline_mode = #tpu.pipeline_mode<synchronous>, transform_indices = @transform_15, window_bounds = array<i64: 1, 1>}]} {
    %c0 = arith.constant 0 : index
    %c0_0 = arith.constant 0 : index
    %0 = vector.load %arg1[%c0, %c0_0] : memref<1024x27xbf16, #tpu.memory_space<vmem>>, vector<1024x27xbf16>
    %c0_1 = arith.constant 0 : index
    %c0_2 = arith.constant 0 : index
    %1 = vector.load %arg2[%c0_1, %c0_2] : memref<27x128xbf16, #tpu.memory_space<vmem>>, vector<27x128xbf16>
    %cst = arith.constant dense<0.000000e+00> : vector<1024x128xf32>
    %2 = tpu.matmul %0, %1, %cst {dimension_numbers = #tpu.dot_dimension_numbers<[1], [0], [0], [1], [0, 0, 1, 1], [], []>} : vector<1024x27xbf16>, vector<27x128xbf16>, vector<1024x128xf32> -> vector<1024x128xf32>
    %c0_3 = arith.constant 0 : index
    %c0_4 = arith.constant 0 : index
    %3 = vector.load %arg3[%c0_3, %c0_4] : memref<1x128xf32, #tpu.memory_space<vmem>>, vector<1x128xf32>
    %4 = vector.broadcast %3 : vector<1x128xf32> to vector<1024x128xf32>
    %5 = arith.addf %2, %4 : vector<1024x128xf32>
    %cst_5 = arith.constant 0.000000e+00 : f32
    %6 = vector.broadcast %cst_5 : f32 to vector<1024x128xf32>
    %7 = arith.maximumf %5, %6 : vector<1024x128xf32>
    %8 = vector.shape_cast %7 : vector<1024x128xf32> to vector<4x256x128xf32>
    %cst_6 = arith.constant dense<0.000000e+00> : vector<4x128xf32>
    %9 = vector.multi_reduction <add>, %8, %cst_6 [1] : vector<4x256x128xf32> to vector<4x128xf32>
    %cst_7 = arith.constant 3.906250e-03 : f32
    %10 = vector.broadcast %cst_7 : f32 to vector<4x128xf32>
    %11 = arith.mulf %9, %10 : vector<4x128xf32>
    %12 = arith.truncf %11 : vector<4x128xf32> to vector<4x128xbf16>
    %c0_8 = arith.constant 0 : index
    %c0_9 = arith.constant 0 : index
    %13 = vector.load %arg4[%c0_8, %c0_9] : memref<128x128xbf16, #tpu.memory_space<vmem>>, vector<128x128xbf16>
    %cst_10 = arith.constant dense<0.000000e+00> : vector<4x128xf32>
    %14 = tpu.matmul %12, %13, %cst_10 {dimension_numbers = #tpu.dot_dimension_numbers<[1], [0], [0], [1], [0, 0, 1, 1], [], []>} : vector<4x128xbf16>, vector<128x128xbf16>, vector<4x128xf32> -> vector<4x128xf32>
    %c0_11 = arith.constant 0 : index
    %c0_12 = arith.constant 0 : index
    %15 = vector.load %arg5[%c0_11, %c0_12] : memref<1x128xf32, #tpu.memory_space<vmem>>, vector<1x128xf32>
    %16 = vector.broadcast %15 : vector<1x128xf32> to vector<4x128xf32>
    %17 = arith.addf %14, %16 : vector<4x128xf32>
    %18 = tpu.iota {dimensions = array<i32: 0>} : vector<4x128xi32>
    %c2_i32 = arith.constant 2 : i32
    %19 = vector.broadcast %c2_i32 : i32 to vector<4x128xi32>
    %20 = arith.cmpi slt, %18, %19 : vector<4x128xi32>
    %21 = arith.extui %20 : vector<4x128xi1> to vector<4x128xi32>
    %22 = arith.sitofp %21 : vector<4x128xi32> to vector<4x128xf32>
    %cst_13 = arith.constant 1.000000e+00 : f32
    %23 = vector.broadcast %cst_13 : f32 to vector<4x128xf32>
    %24 = arith.subf %23, %22 : vector<4x128xf32>
    %25 = arith.mulf %17, %22 : vector<4x128xf32>
    %cst_14 = arith.constant dense<0.000000e+00> : vector<128xf32>
    %26 = vector.multi_reduction <add>, %25, %cst_14 [0] : vector<4x128xf32> to vector<128xf32>
    %27 = vector.shape_cast %26 : vector<128xf32> to vector<1x128xf32>
    %cst_15 = arith.constant 5.000000e-01 : f32
    %28 = vector.broadcast %cst_15 : f32 to vector<1x128xf32>
    %29 = arith.mulf %27, %28 : vector<1x128xf32>
    %30 = arith.mulf %17, %24 : vector<4x128xf32>
    %cst_16 = arith.constant dense<0.000000e+00> : vector<128xf32>
    %31 = vector.multi_reduction <add>, %30, %cst_16 [0] : vector<4x128xf32> to vector<128xf32>
    %32 = vector.shape_cast %31 : vector<128xf32> to vector<1x128xf32>
    %cst_17 = arith.constant 5.000000e-01 : f32
    %33 = vector.broadcast %cst_17 : f32 to vector<1x128xf32>
    %34 = arith.mulf %32, %33 : vector<1x128xf32>
    %35 = vector.broadcast %29 : vector<1x128xf32> to vector<4x128xf32>
    %36 = arith.mulf %22, %35 : vector<4x128xf32>
    %37 = vector.broadcast %34 : vector<1x128xf32> to vector<4x128xf32>
    %38 = arith.mulf %24, %37 : vector<4x128xf32>
    %39 = arith.addf %36, %38 : vector<4x128xf32>
    %40 = arith.subf %17, %39 : vector<4x128xf32>
    %41 = arith.mulf %40, %40 : vector<4x128xf32>
    %42 = arith.mulf %41, %22 : vector<4x128xf32>
    %cst_18 = arith.constant dense<0.000000e+00> : vector<128xf32>
    %43 = vector.multi_reduction <add>, %42, %cst_18 [0] : vector<4x128xf32> to vector<128xf32>
    %44 = vector.shape_cast %43 : vector<128xf32> to vector<1x128xf32>
    %cst_19 = arith.constant 5.000000e-01 : f32
    %45 = vector.broadcast %cst_19 : f32 to vector<1x128xf32>
    %46 = arith.mulf %44, %45 : vector<1x128xf32>
    %47 = arith.mulf %40, %40 : vector<4x128xf32>
    %48 = arith.mulf %47, %24 : vector<4x128xf32>
    %cst_20 = arith.constant dense<0.000000e+00> : vector<128xf32>
    %49 = vector.multi_reduction <add>, %48, %cst_20 [0] : vector<4x128xf32> to vector<128xf32>
    %50 = vector.shape_cast %49 : vector<128xf32> to vector<1x128xf32>
    %cst_21 = arith.constant 5.000000e-01 : f32
    %51 = vector.broadcast %cst_21 : f32 to vector<1x128xf32>
    %52 = arith.mulf %50, %51 : vector<1x128xf32>
    %53 = vector.broadcast %46 : vector<1x128xf32> to vector<4x128xf32>
    %54 = arith.mulf %22, %53 : vector<4x128xf32>
    %55 = vector.broadcast %52 : vector<1x128xf32> to vector<4x128xf32>
    %56 = arith.mulf %24, %55 : vector<4x128xf32>
    %57 = arith.addf %54, %56 : vector<4x128xf32>
    %cst_22 = arith.constant 9.99999974E-6 : f32
    %58 = vector.broadcast %cst_22 : f32 to vector<4x128xf32>
    %59 = arith.addf %57, %58 : vector<4x128xf32>
    %60 = math.rsqrt %59 : vector<4x128xf32>
    %61 = arith.mulf %40, %60 : vector<4x128xf32>
    %c0_23 = arith.constant 0 : index
    %c0_24 = arith.constant 0 : index
    %62 = vector.load %arg6[%c0_23, %c0_24] : memref<1x128xf32, #tpu.memory_space<vmem>>, vector<1x128xf32>
    %63 = vector.broadcast %62 : vector<1x128xf32> to vector<4x128xf32>
    %64 = arith.mulf %61, %63 : vector<4x128xf32>
    %c0_25 = arith.constant 0 : index
    %c0_26 = arith.constant 0 : index
    %65 = vector.load %arg7[%c0_25, %c0_26] : memref<1x128xf32, #tpu.memory_space<vmem>>, vector<1x128xf32>
    %66 = vector.broadcast %65 : vector<1x128xf32> to vector<4x128xf32>
    %67 = arith.addf %64, %66 : vector<4x128xf32>
    %cst_27 = arith.constant 0.000000e+00 : f32
    %68 = vector.broadcast %cst_27 : f32 to vector<4x128xf32>
    %69 = arith.maximumf %67, %68 : vector<4x128xf32>
    %70 = arith.truncf %69 : vector<4x128xf32> to vector<4x128xbf16>
    %c0_28 = arith.constant 0 : index
    %c0_29 = arith.constant 0 : index
    %71 = vector.load %arg8[%c0_28, %c0_29] : memref<128x128xbf16, #tpu.memory_space<vmem>>, vector<128x128xbf16>
    %cst_30 = arith.constant dense<0.000000e+00> : vector<4x128xf32>
    %72 = tpu.matmul %70, %71, %cst_30 {dimension_numbers = #tpu.dot_dimension_numbers<[1], [0], [0], [1], [0, 0, 1, 1], [], []>} : vector<4x128xbf16>, vector<128x128xbf16>, vector<4x128xf32> -> vector<4x128xf32>
    %c0_31 = arith.constant 0 : index
    %c0_32 = arith.constant 0 : index
    %73 = vector.load %arg9[%c0_31, %c0_32] : memref<1x128xf32, #tpu.memory_space<vmem>>, vector<1x128xf32>
    %74 = vector.broadcast %73 : vector<1x128xf32> to vector<4x128xf32>
    %75 = arith.addf %72, %74 : vector<4x128xf32>
    %76 = arith.truncf %75 : vector<4x128xf32> to vector<4x128xbf16>
    %c0_33 = arith.constant 0 : index
    %c0_34 = arith.constant 0 : index
    %77 = vector.load %arg10[%c0_33, %c0_34] : memref<128x128xbf16, #tpu.memory_space<vmem>>, vector<128x128xbf16>
    %cst_35 = arith.constant dense<0.000000e+00> : vector<4x128xf32>
    %78 = tpu.matmul %76, %77, %cst_35 {dimension_numbers = #tpu.dot_dimension_numbers<[1], [0], [0], [1], [0, 0, 1, 1], [], []>} : vector<4x128xbf16>, vector<128x128xbf16>, vector<4x128xf32> -> vector<4x128xf32>
    %c0_36 = arith.constant 0 : index
    %c0_37 = arith.constant 0 : index
    %79 = vector.load %arg11[%c0_36, %c0_37] : memref<1x128xf32, #tpu.memory_space<vmem>>, vector<1x128xf32>
    %80 = vector.broadcast %79 : vector<1x128xf32> to vector<4x128xf32>
    %81 = arith.addf %78, %80 : vector<4x128xf32>
    %82 = tpu.iota {dimensions = array<i32: 0>} : vector<4x128xi32>
    %c2_i32_38 = arith.constant 2 : i32
    %83 = vector.broadcast %c2_i32_38 : i32 to vector<4x128xi32>
    %84 = arith.cmpi slt, %82, %83 : vector<4x128xi32>
    %85 = arith.extui %84 : vector<4x128xi1> to vector<4x128xi32>
    %86 = arith.sitofp %85 : vector<4x128xi32> to vector<4x128xf32>
    %cst_39 = arith.constant 1.000000e+00 : f32
    %87 = vector.broadcast %cst_39 : f32 to vector<4x128xf32>
    %88 = arith.subf %87, %86 : vector<4x128xf32>
    %89 = arith.mulf %81, %86 : vector<4x128xf32>
    %cst_40 = arith.constant dense<0.000000e+00> : vector<128xf32>
    %90 = vector.multi_reduction <add>, %89, %cst_40 [0] : vector<4x128xf32> to vector<128xf32>
    %91 = vector.shape_cast %90 : vector<128xf32> to vector<1x128xf32>
    %cst_41 = arith.constant 5.000000e-01 : f32
    %92 = vector.broadcast %cst_41 : f32 to vector<1x128xf32>
    %93 = arith.mulf %91, %92 : vector<1x128xf32>
    %94 = arith.mulf %81, %88 : vector<4x128xf32>
    %cst_42 = arith.constant dense<0.000000e+00> : vector<128xf32>
    %95 = vector.multi_reduction <add>, %94, %cst_42 [0] : vector<4x128xf32> to vector<128xf32>
    %96 = vector.shape_cast %95 : vector<128xf32> to vector<1x128xf32>
    %cst_43 = arith.constant 5.000000e-01 : f32
    %97 = vector.broadcast %cst_43 : f32 to vector<1x128xf32>
    %98 = arith.mulf %96, %97 : vector<1x128xf32>
    %99 = vector.broadcast %93 : vector<1x128xf32> to vector<4x128xf32>
    %100 = arith.mulf %86, %99 : vector<4x128xf32>
    %101 = vector.broadcast %98 : vector<1x128xf32> to vector<4x128xf32>
    %102 = arith.mulf %88, %101 : vector<4x128xf32>
    %103 = arith.addf %100, %102 : vector<4x128xf32>
    %104 = arith.subf %81, %103 : vector<4x128xf32>
    %105 = arith.mulf %104, %104 : vector<4x128xf32>
    %106 = arith.mulf %105, %86 : vector<4x128xf32>
    %cst_44 = arith.constant dense<0.000000e+00> : vector<128xf32>
    %107 = vector.multi_reduction <add>, %106, %cst_44 [0] : vector<4x128xf32> to vector<128xf32>
    %108 = vector.shape_cast %107 : vector<128xf32> to vector<1x128xf32>
    %cst_45 = arith.constant 5.000000e-01 : f32
    %109 = vector.broadcast %cst_45 : f32 to vector<1x128xf32>
    %110 = arith.mulf %108, %109 : vector<1x128xf32>
    %111 = arith.mulf %104, %104 : vector<4x128xf32>
    %112 = arith.mulf %111, %88 : vector<4x128xf32>
    %cst_46 = arith.constant dense<0.000000e+00> : vector<128xf32>
    %113 = vector.multi_reduction <add>, %112, %cst_46 [0] : vector<4x128xf32> to vector<128xf32>
    %114 = vector.shape_cast %113 : vector<128xf32> to vector<1x128xf32>
    %cst_47 = arith.constant 5.000000e-01 : f32
    %115 = vector.broadcast %cst_47 : f32 to vector<1x128xf32>
    %116 = arith.mulf %114, %115 : vector<1x128xf32>
    %117 = vector.broadcast %110 : vector<1x128xf32> to vector<4x128xf32>
    %118 = arith.mulf %86, %117 : vector<4x128xf32>
    %119 = vector.broadcast %116 : vector<1x128xf32> to vector<4x128xf32>
    %120 = arith.mulf %88, %119 : vector<4x128xf32>
    %121 = arith.addf %118, %120 : vector<4x128xf32>
    %cst_48 = arith.constant 9.99999974E-6 : f32
    %122 = vector.broadcast %cst_48 : f32 to vector<4x128xf32>
    %123 = arith.addf %121, %122 : vector<4x128xf32>
    %124 = math.rsqrt %123 : vector<4x128xf32>
    %125 = arith.mulf %104, %124 : vector<4x128xf32>
    %c0_49 = arith.constant 0 : index
    %c0_50 = arith.constant 0 : index
    %126 = vector.load %arg12[%c0_49, %c0_50] : memref<1x128xf32, #tpu.memory_space<vmem>>, vector<1x128xf32>
    %127 = vector.broadcast %126 : vector<1x128xf32> to vector<4x128xf32>
    %128 = arith.mulf %125, %127 : vector<4x128xf32>
    %c0_51 = arith.constant 0 : index
    %c0_52 = arith.constant 0 : index
    %129 = vector.load %arg13[%c0_51, %c0_52] : memref<1x128xf32, #tpu.memory_space<vmem>>, vector<1x128xf32>
    %130 = vector.broadcast %129 : vector<1x128xf32> to vector<4x128xf32>
    %131 = arith.addf %128, %130 : vector<4x128xf32>
    %cst_53 = arith.constant 0.000000e+00 : f32
    %132 = vector.broadcast %cst_53 : f32 to vector<4x128xf32>
    %133 = arith.maximumf %131, %132 : vector<4x128xf32>
    %134 = arith.truncf %133 : vector<4x128xf32> to vector<4x128xbf16>
    %c0_54 = arith.constant 0 : index
    %c0_55 = arith.constant 0 : index
    %135 = vector.load %arg14[%c0_54, %c0_55] : memref<128x128xbf16, #tpu.memory_space<vmem>>, vector<128x128xbf16>
    %cst_56 = arith.constant dense<0.000000e+00> : vector<4x128xf32>
    %136 = tpu.matmul %134, %135, %cst_56 {dimension_numbers = #tpu.dot_dimension_numbers<[1], [0], [0], [1], [0, 0, 1, 1], [], []>} : vector<4x128xbf16>, vector<128x128xbf16>, vector<4x128xf32> -> vector<4x128xf32>
    %c0_57 = arith.constant 0 : index
    %c0_58 = arith.constant 0 : index
    %137 = vector.load %arg15[%c0_57, %c0_58] : memref<1x128xf32, #tpu.memory_space<vmem>>, vector<1x128xf32>
    %138 = vector.broadcast %137 : vector<1x128xf32> to vector<4x128xf32>
    %139 = arith.addf %136, %138 : vector<4x128xf32>
    %140 = arith.mulf %139, %139 : vector<4x128xf32>
    %cst_59 = arith.constant dense<0.000000e+00> : vector<4xf32>
    %141 = vector.multi_reduction <add>, %140, %cst_59 [1] : vector<4x128xf32> to vector<4xf32>
    %142 = vector.shape_cast %141 : vector<4xf32> to vector<4x1xf32>
    %cst_60 = arith.constant 1.000000e-24 : f32
    %143 = vector.broadcast %cst_60 : f32 to vector<4x1xf32>
    %144 = arith.maximumf %142, %143 : vector<4x1xf32>
    %145 = math.rsqrt %144 : vector<4x1xf32>
    %146 = vector.broadcast %145 : vector<4x1xf32> to vector<4x128xf32>
    %147 = arith.mulf %139, %146 : vector<4x128xf32>
    %148 = arith.mulf %75, %75 : vector<4x128xf32>
    %cst_61 = arith.constant dense<0.000000e+00> : vector<4xf32>
    %149 = vector.multi_reduction <add>, %148, %cst_61 [1] : vector<4x128xf32> to vector<4xf32>
    %150 = vector.shape_cast %149 : vector<4xf32> to vector<4x1xf32>
    %cst_62 = arith.constant 1.000000e-24 : f32
    %151 = vector.broadcast %cst_62 : f32 to vector<4x1xf32>
    %152 = arith.maximumf %150, %151 : vector<4x1xf32>
    %153 = math.rsqrt %152 : vector<4x1xf32>
    %154 = vector.broadcast %153 : vector<4x1xf32> to vector<4x128xf32>
    %155 = arith.mulf %75, %154 : vector<4x128xf32>
    %cst_63 = arith.constant dense<0.000000e+00> : vector<4x4xf32>
    %156 = tpu.matmul %147, %155, %cst_63 {dimension_numbers = #tpu.dot_dimension_numbers<[1], [1], [0], [0], [0, 0, 1, 0], [], []>} : vector<4x128xf32>, vector<4x128xf32>, vector<4x4xf32> -> vector<4x4xf32>
    %157 = tpu.iota {dimensions = array<i32: 0>} : vector<4x4xi32>
    %158 = tpu.iota {dimensions = array<i32: 1>} : vector<4x4xi32>
    %c2_i32_64 = arith.constant 2 : i32
    %159 = vector.broadcast %c2_i32_64 : i32 to vector<4x4xi32>
    %160 = arith.addi %157, %159 : vector<4x4xi32>
    %c4_i32 = arith.constant 4 : i32
    %c0_i32 = arith.constant 0 : i32
    %161 = arith.cmpi eq, %c4_i32, %c0_i32 : i32
    %c1_i32 = arith.constant 1 : i32
    %162 = arith.select %161, %c1_i32, %c4_i32 : i32
    %163 = vector.broadcast %162 : i32 to vector<4x4xi32>
    %164 = arith.remsi %160, %163 : vector<4x4xi32>
    %c0_i32_65 = arith.constant 0 : i32
    %165 = vector.broadcast %c0_i32_65 : i32 to vector<4x4xi32>
    %166 = arith.cmpi ne, %164, %165 : vector<4x4xi32>
    %c0_i32_66 = arith.constant 0 : i32
    %167 = vector.broadcast %c0_i32_66 : i32 to vector<4x4xi32>
    %168 = arith.cmpi slt, %164, %167 : vector<4x4xi32>
    %c0_i32_67 = arith.constant 0 : i32
    %169 = arith.cmpi slt, %162, %c0_i32_67 : i32
    %170 = vector.broadcast %169 : i1 to vector<4x4xi1>
    %171 = vector.broadcast %170 : vector<4x4xi1> to vector<4x4xi1>
    %172 = arith.xori %168, %171 : vector<4x4xi1>
    %173 = arith.andi %172, %166 : vector<4x4xi1>
    %174 = vector.broadcast %162 : i32 to vector<4x4xi32>
    %175 = arith.addi %164, %174 : vector<4x4xi32>
    %176 = arith.select %173, %175, %164 : vector<4x4xi1>, vector<4x4xi32>
    %177 = arith.cmpi eq, %158, %176 : vector<4x4xi32>
    %cst_68 = arith.constant 0.000000e+00 : f32
    %178 = vector.broadcast %cst_68 : f32 to vector<4x4xf32>
    %179 = arith.select %177, %156, %178 : vector<4x4xi1>, vector<4x4xf32>
    %cst_69 = arith.constant dense<0.000000e+00> : vector<4xf32>
    %180 = vector.multi_reduction <add>, %179, %cst_69 [1] : vector<4x4xf32> to vector<4xf32>
    %181 = vector.shape_cast %180 : vector<4xf32> to vector<4x1xf32>
    %cst_70 = arith.constant 2.000000e+00 : f32
    %182 = vector.broadcast %cst_70 : f32 to vector<4x1xf32>
    %183 = arith.mulf %182, %181 : vector<4x1xf32>
    %cst_71 = arith.constant 2.000000e+00 : f32
    %184 = vector.broadcast %cst_71 : f32 to vector<4x1xf32>
    %185 = arith.subf %184, %183 : vector<4x1xf32>
    %cst_72 = arith.constant dense<0.000000e+00> : vector<1xf32>
    %186 = vector.multi_reduction <add>, %185, %cst_72 [0] : vector<4x1xf32> to vector<1xf32>
    %187 = vector.shape_cast %186 : vector<1xf32> to vector<1x1xf32>
    %cst_73 = arith.constant 5.000000e-01 : f32
    %188 = vector.broadcast %cst_73 : f32 to vector<1x1xf32>
    %189 = arith.mulf %187, %188 : vector<1x1xf32>
    %c0_74 = arith.constant 0 : index
    %c0_75 = arith.constant 0 : index
    %190 = vector.load %arg16[%c0_74, %c0_75] : memref<1x1xf32, #tpu.memory_space<vmem>>, vector<1x1xf32>
    tpu.vector_store %arg16[%c0_74, %c0_75], %189 {strides = array<i32>} : memref<1x1xf32, #tpu.memory_space<vmem>>, vector<1x1xf32>,
    return
  }
  func.func @transform_0(%arg0: i32) -> (i32, i32) {
    %c0_i32 = arith.constant 0 : i32
    %c0_i32_0 = arith.constant 0 : i32
    %c0_i32_1 = arith.constant 0 : i32
    return %c0_i32, %c0_i32_0 : i32, i32
  }
  func.func @transform_1(%arg0: i32) -> (i32, i32) {
    %c0_i32 = arith.constant 0 : i32
    %c0_i32_0 = arith.constant 0 : i32
    %c0_i32_1 = arith.constant 0 : i32
    return %c0_i32, %c0_i32_0 : i32, i32
  }
  func.func @transform_2(%arg0: i32) -> (i32, i32) {
    %c0_i32 = arith.constant 0 : i32
    %c0_i32_0 = arith.constant 0 : i32
    %c0_i32_1 = arith.constant 0 : i32
    return %c0_i32, %c0_i32_0 : i32, i32
  }
  func.func @transform_3(%arg0: i32) -> (i32, i32) {
    %c0_i32 = arith.constant 0 : i32
    %c0_i32_0 = arith.constant 0 : i32
    %c0_i32_1 = arith.constant 0 : i32
    return %c0_i32, %c0_i32_0 : i32, i32
  }
  func.func @transform_4(%arg0: i32) -> (i32, i32) {
    %c0_i32 = arith.constant 0 : i32
    %c0_i32_0 = arith.constant 0 : i32
    %c0_i32_1 = arith.constant 0 : i32
    return %c0_i32, %c0_i32_0 : i32, i32
  }
  func.func @transform_5(%arg0: i32) -> (i32, i32) {
    %c0_i32 = arith.constant 0 : i32
    %c0_i32_0 = arith.constant 0 : i32
    %c0_i32_1 = arith.constant 0 : i32
    return %c0_i32, %c0_i32_0 : i32, i32
  }
  func.func @transform_6(%arg0: i32) -> (i32, i32) {
    %c0_i32 = arith.constant 0 : i32
    %c0_i32_0 = arith.constant 0 : i32
    %c0_i32_1 = arith.constant 0 : i32
    return %c0_i32, %c0_i32_0 : i32, i32
  }
  func.func @transform_7(%arg0: i32) -> (i32, i32) {
    %c0_i32 = arith.constant 0 : i32
    %c0_i32_0 = arith.constant 0 : i32
    %c0_i32_1 = arith.constant 0 : i32
    return %c0_i32, %c0_i32_0 : i32, i32
  }
  func.func @transform_8(%arg0: i32) -> (i32, i32) {
    %c0_i32 = arith.constant 0 : i32
    %c0_i32_0 = arith.constant 0 : i32
    %c0_i32_1 = arith.constant 0 : i32
    return %c0_i32, %c0_i32_0 : i32, i32
  }
  func.func @transform_9(%arg0: i32) -> (i32, i32) {
    %c0_i32 = arith.constant 0 : i32
    %c0_i32_0 = arith.constant 0 : i32
    %c0_i32_1 = arith.constant 0 : i32
    return %c0_i32, %c0_i32_0 : i32, i32
  }
  func.func @transform_10(%arg0: i32) -> (i32, i32) {
    %c0_i32 = arith.constant 0 : i32
    %c0_i32_0 = arith.constant 0 : i32
    %c0_i32_1 = arith.constant 0 : i32
    return %c0_i32, %c0_i32_0 : i32, i32
  }
  func.func @transform_11(%arg0: i32) -> (i32, i32) {
    %c0_i32 = arith.constant 0 : i32
    %c0_i32_0 = arith.constant 0 : i32
    %c0_i32_1 = arith.constant 0 : i32
    return %c0_i32, %c0_i32_0 : i32, i32
  }
  func.func @transform_12(%arg0: i32) -> (i32, i32) {
    %c0_i32 = arith.constant 0 : i32
    %c0_i32_0 = arith.constant 0 : i32
    %c0_i32_1 = arith.constant 0 : i32
    return %c0_i32, %c0_i32_0 : i32, i32
  }
  func.func @transform_13(%arg0: i32) -> (i32, i32) {
    %c0_i32 = arith.constant 0 : i32
    %c0_i32_0 = arith.constant 0 : i32
    %c0_i32_1 = arith.constant 0 : i32
    return %c0_i32, %c0_i32_0 : i32, i32
  }
  func.func @transform_14(%arg0: i32) -> (i32, i32) {
    %c0_i32 = arith.constant 0 : i32
    %c0_i32_0 = arith.constant 0 : i32
    %c0_i32_1 = arith.constant 0 : i32
    return %c0_i32, %c0_i32_0 : i32, i32
  }
  func.func @transform_15(%arg0: i32) -> (i32, i32) {
    %c0_i32 = arith.constant 0 : i32
    %c0_i32_0 = arith.constant 0 : i32
    %c0_i32_1 = arith.constant 0 : i32
    return %c0_i32, %c0_i32_0 : i32, i32
  }
}

</mosaic_0001>

<llo_original>
// kernel: byol_forward.1
$region0: #{byol_forward.1}
  #allocation0 [shape = 'u32[]', space=smem, size = 0x4, offset = 0x4, fixed_abs, tag = 'smem constant byte address 0x4 - core index']
  #allocation1 [shape = 'u32[144,128]{1,0:T(1,128)}', space=vmem, size = 0x12000, scoped, tag = 'internal scratch']
  %s0 = inlined_call_operand.vmem [shape: bf16[1024,27], index: 0, kind: input, shape index: {}]
  %s1 = inlined_call_operand.vmem [shape: bf16[27,128], index: 1, kind: input, shape index: {}]
  %s2 = inlined_call_operand.vmem [shape: f32[1,128], index: 2, kind: input, shape index: {}]
  %s3 = inlined_call_operand.vmem [shape: bf16[128,128], index: 3, kind: input, shape index: {}]
  %s4 = inlined_call_operand.vmem [shape: f32[1,128], index: 4, kind: input, shape index: {}]
  %s5 = inlined_call_operand.vmem [shape: f32[1,128], index: 5, kind: input, shape index: {}]
  %s6 = inlined_call_operand.vmem [shape: f32[1,128], index: 6, kind: input, shape index: {}]
  %s7 = inlined_call_operand.vmem [shape: bf16[128,128], index: 7, kind: input, shape index: {}]
  %s8 = inlined_call_operand.vmem [shape: f32[1,128], index: 8, kind: input, shape index: {}]
  %s9 = inlined_call_operand.vmem [shape: bf16[128,128], index: 9, kind: input, shape index: {}]
  %s10 = inlined_call_operand.vmem [shape: f32[1,128], index: 10, kind: input, shape index: {}]
  %s11 = inlined_call_operand.vmem [shape: f32[1,128], index: 11, kind: input, shape index: {}]
  %s12 = inlined_call_operand.vmem [shape: f32[1,128], index: 12, kind: input, shape index: {}]
  %s13 = inlined_call_operand.vmem [shape: bf16[128,128], index: 13, kind: input, shape index: {}]
  %s14 = inlined_call_operand.vmem [shape: f32[1,128], index: 14, kind: input, shape index: {}]
  %s15 = inlined_call_operand.hbm [shape: f32[1,1], index: 15, kind: output, shape index: {}]
  %s16 = sld [smem:[#allocation0]]
  $region70: #{byol_forward.1} parent=0
    _
  %s18 = ssub.s32 1, %s16
  %s19 = scalar_select 0, %s18, %s16
  $region1: #{byol_forward.1} parent=0
    #allocation2 [shape = 'u8[512]{0}', space=vmem, size = 0x400, scoped, tag = 'output window, operand 0, single buffered']
    #allocation3 [shape = 's32[1]{0}', space=sflag, size = 0x4, scoped, tag = 'scoped memory for byol_forward.1']
    %20 = vsyncpa [#allocation3], 0
    // Predicated region
    $region2: #{byol_forward.1} parent=1 // pred_check
      _
    $region3: #{byol_forward.1} parent=1 // pred_check_branch
      %22 = sbr.rel (0) target = $region5
    $region4: #{byol_forward.1} parent=1 // pred_region
      _
    $region5: #{byol_forward.1} parent=1 // pred_fallthru
      _
    // Predicated region
    $region6: #{byol_forward.1} parent=1 // pred_check
      _
    $region7: #{byol_forward.1} parent=1 // pred_check_branch
      %24 = sbr.rel (0) target = $region9
    $region8: #{byol_forward.1} parent=1 // pred_region
      _
    $region9: #{byol_forward.1} parent=1 // pred_fallthru
      _
    // Predicated region
    $region10: #{byol_forward.1} parent=1 // pred_check
      _
    $region11: #{byol_forward.1} parent=1 // pred_check_branch
      %26 = sbr.rel (0) target = $region13
    $region12: #{byol_forward.1} parent=1 // pred_region
      _
    $region13: #{byol_forward.1} parent=1 // pred_fallthru
      _
    // Predicated region
    $region14: #{byol_forward.1} parent=1 // pred_check
      _
    $region15: #{byol_forward.1} parent=1 // pred_check_branch
      %28 = sbr.rel (0) target = $region17
    $region16: #{byol_forward.1} parent=1 // pred_region
      _
    $region17: #{byol_forward.1} parent=1 // pred_fallthru
      _
    // Predicated region
    $region18: #{byol_forward.1} parent=1 // pred_check
      _
    $region19: #{byol_forward.1} parent=1 // pred_check_branch
      %30 = sbr.rel (0) target = $region21
    $region20: #{byol_forward.1} parent=1 // pred_region
      _
    $region21: #{byol_forward.1} parent=1 // pred_fallthru
      _
    // Predicated region
    $region22: #{byol_forward.1} parent=1 // pred_check
      _
    $region23: #{byol_forward.1} parent=1 // pred_check_branch
      %32 = sbr.rel (0) target = $region25
    $region24: #{byol_forward.1} parent=1 // pred_region
      _
    $region25: #{byol_forward.1} parent=1 // pred_fallthru
      _
    // Predicated region
    $region26: #{byol_forward.1} parent=1 // pred_check
      _
    $region27: #{byol_forward.1} parent=1 // pred_check_branch
      %34 = sbr.rel (0) target = $region29
    $region28: #{byol_forward.1} parent=1 // pred_region
      _
    $region29: #{byol_forward.1} parent=1 // pred_fallthru
      _
    // Predicated region
    $region30: #{byol_forward.1} parent=1 // pred_check
      _
    $region31: #{byol_forward.1} parent=1 // pred_check_branch
      %36 = sbr.rel (0) target = $region33
    $region32: #{byol_forward.1} parent=1 // pred_region
      _
    $region33: #{byol_forward.1} parent=1 // pred_fallthru
      _
    // Predicated region
    $region34: #{byol_forward.1} parent=1 // pred_check
      _
    $region35: #{byol_forward.1} parent=1 // pred_check_branch
      %38 = sbr.rel (0) target = $region37
    $region36: #{byol_forward.1} parent=1 // pred_region
      _
    $region37: #{byol_forward.1} parent=1 // pred_fallthru
      _
    // Predicated region
    $region38: #{byol_forward.1} parent=1 // pred_check
      _
    $region39: #{byol_forward.1} parent=1 // pred_check_branch
      %40 = sbr.rel (0) target = $region41
    $region40: #{byol_forward.1} parent=1 // pred_region
      _
    $region41: #{byol_forward.1} parent=1 // pred_fallthru
      _
    // Predicated region
    $region42: #{byol_forward.1} parent=1 // pred_check
      _
    $region43: #{byol_forward.1} parent=1 // pred_check_branch
      %42 = sbr.rel (0) target = $region45
    $region44: #{byol_forward.1} parent=1 // pred_region
      _
    $region45: #{byol_forward.1} parent=1 // pred_fallthru
      _
    // Predicated region
    $region46: #{byol_forward.1} parent=1 // pred_check
      _
    $region47: #{byol_forward.1} parent=1 // pred_check_branch
      %44 = sbr.rel (0) target = $region49
    $region48: #{byol_forward.1} parent=1 // pred_region
      _
    $region49: #{byol_forward.1} parent=1 // pred_fallthru
      _
    // Predicated region
    $region50: #{byol_forward.1} parent=1 // pred_check
      _
    $region51: #{byol_forward.1} parent=1 // pred_check_branch
      %46 = sbr.rel (0) target = $region53
    $region52: #{byol_forward.1} parent=1 // pred_region
      _
    $region53: #{byol_forward.1} parent=1 // pred_fallthru
      _
    // Predicated region
    $region54: #{byol_forward.1} parent=1 // pred_check
      _
    $region55: #{byol_forward.1} parent=1 // pred_check_branch
      %48 = sbr.rel (0) target = $region57
    $region56: #{byol_forward.1} parent=1 // pred_region
      _
    $region57: #{byol_forward.1} parent=1 // pred_fallthru
      _
    // Predicated region
    $region58: #{byol_forward.1} parent=1 // pred_check
      _
    $region59: #{byol_forward.1} parent=1 // pred_check_branch
      %50 = sbr.rel (0) target = $region61
    $region60: #{byol_forward.1} parent=1 // pred_region
      _
    $region61: #{byol_forward.1} parent=1 // pred_fallthru
      _
    %v52 = vld [vmem:[%s0] sm:$0xf]
    %v53 = vld [vmem:[%s0 + $0x4] sm:$0xf]
    %v54 = vld [vmem:[%s0 + $0x8] sm:$0xf]
    %v55 = vld [vmem:[%s0 + $0xc] sm:$0xf]
    %v56 = vld [vmem:[%s0 + $0x10] sm:$0xf]
    %v57 = vld [vmem:[%s0 + $0x14] sm:$0xf]
    %v58 = vld [vmem:[%s0 + $0x18] sm:$0xf]
    %v59 = vld [vmem:[%s0 + $0x1c] sm:$0xf]
    %v60 = vld [vmem:[%s0 + $0x20] sm:$0xf]
    %v61 = vld [vmem:[%s0 + $0x24] sm:$0xf]
    %v62 = vld [vmem:[%s0 + $0x28] sm:$0xf]
    %v63 = vld [vmem:[%s0 + $0x2c] sm:$0xf]
    %v64 = vld [vmem:[%s0 + $0x30] sm:$0xf]
    %v65 = vld [vmem:[%s0 + $0x34] sm:$0xf]
    %v66 = vld [vmem:[%s0 + $0x38] sm:$0xf]
    %v67 = vld [vmem:[%s0 + $0x3c] sm:$0xf]
    %v68 = vld [vmem:[%s0 + $0x40] sm:$0xf]
    %v69 = vld [vmem:[%s0 + $0x44] sm:$0xf]
    %v70 = vld [vmem:[%s0 + $0x48] sm:$0xf]
    %v71 = vld [vmem:[%s0 + $0x4c] sm:$0xf]
    %v72 = vld [vmem:[%s0 + $0x50] sm:$0xf]
    %v73 = vld [vmem:[%s0 + $0x54] sm:$0xf]
    %v74 = vld [vmem:[%s0 + $0x58] sm:$0xf]
    %v75 = vld [vmem:[%s0 + $0x5c] sm:$0xf]
    %v76 = vld [vmem:[%s0 + $0x60] sm:$0xf]
    %v77 = vld [vmem:[%s0 + $0x64] sm:$0xf]
    %v78 = vld [vmem:[%s0 + $0x68] sm:$0xf]
    %v79 = vld [vmem:[%s0 + $0x6c] sm:$0xf]
    %v80 = vld [vmem:[%s0 + $0x70] sm:$0xf]
    %v81 = vld [vmem:[%s0 + $0x74] sm:$0xf]
    %v82 = vld [vmem:[%s0 + $0x78] sm:$0xf]
    %v83 = vld [vmem:[%s0 + $0x7c] sm:$0xf]
    %v84 = vld [vmem:[%s0 + $0x80] sm:$0xf]
    %v85 = vld [vmem:[%s0 + $0x84] sm:$0xf]
    %v86 = vld [vmem:[%s0 + $0x88] sm:$0xf]
    %v87 = vld [vmem:[%s0 + $0x8c] sm:$0xf]
    %v88 = vld [vmem:[%s0 + $0x90] sm:$0xf]
    %v89 = vld [vmem:[%s0 + $0x94] sm:$0xf]
    %v90 = vld [vmem:[%s0 + $0x98] sm:$0xf]
    %v91 = vld [vmem:[%s0 + $0x9c] sm:$0xf]
    %v92 = vld [vmem:[%s0 + $0xa0] sm:$0xf]
    %v93 = vld [vmem:[%s0 + $0xa4] sm:$0xf]
    %v94 = vld [vmem:[%s0 + $0xa8] sm:$0xf]
    %v95 = vld [vmem:[%s0 + $0xac] sm:$0xf]
    %v96 = vld [vmem:[%s0 + $0xb0] sm:$0xf]
    %v97 = vld [vmem:[%s0 + $0xb4] sm:$0xf]
    %v98 = vld [vmem:[%s0 + $0xb8] sm:$0xf]
    %v99 = vld [vmem:[%s0 + $0xbc] sm:$0xf]
    %v100 = vld [vmem:[%s0 + $0xc0] sm:$0xf]
    %v101 = vld [vmem:[%s0 + $0xc4] sm:$0xf]
    %v102 = vld [vmem:[%s0 + $0xc8] sm:$0xf]
    %v103 = vld [vmem:[%s0 + $0xcc] sm:$0xf]
    %v104 = vld [vmem:[%s0 + $0xd0] sm:$0xf]
    %v105 = vld [vmem:[%s0 + $0xd4] sm:$0xf]
    %v106 = vld [vmem:[%s0 + $0xd8] sm:$0xf]
    %v107 = vld [vmem:[%s0 + $0xdc] sm:$0xf]
    %v108 = vld [vmem:[%s0 + $0xe0] sm:$0xf]
    %v109 = vld [vmem:[%s0 + $0xe4] sm:$0xf]
    %v110 = vld [vmem:[%s0 + $0xe8] sm:$0xf]
    %v111 = vld [vmem:[%s0 + $0xec] sm:$0xf]
    %v112 = vld [vmem:[%s0 + $0xf0] sm:$0xf]
    %v113 = vld [vmem:[%s0 + $0xf4] sm:$0xf]
    %v114 = vld [vmem:[%s0 + $0xf8] sm:$0xf]
    %v115 = vld [vmem:[%s0 + $0xfc] sm:$0xf]
    %v116 = vld [vmem:[%s0 + $0x100] sm:$0xf]
    %v117 = vld [vmem:[%s0 + $0x104] sm:$0xf]
    %v118 = vld [vmem:[%s0 + $0x108] sm:$0xf]
    %v119 = vld [vmem:[%s0 + $0x10c] sm:$0xf]
    %v120 = vld [vmem:[%s0 + $0x110] sm:$0xf]
    %v121 = vld [vmem:[%s0 + $0x114] sm:$0xf]
    %v122 = vld [vmem:[%s0 + $0x118] sm:$0xf]
    %v123 = vld [vmem:[%s0 + $0x11c] sm:$0xf]
    %v124 = vld [vmem:[%s0 + $0x120] sm:$0xf]
    %v125 = vld [vmem:[%s0 + $0x124] sm:$0xf]
    %v126 = vld [vmem:[%s0 + $0x128] sm:$0xf]
    %v127 = vld [vmem:[%s0 + $0x12c] sm:$0xf]
    %v128 = vld [vmem:[%s0 + $0x130] sm:$0xf]
    %v129 = vld [vmem:[%s0 + $0x134] sm:$0xf]
    %v130 = vld [vmem:[%s0 + $0x138] sm:$0xf]
    %v131 = vld [vmem:[%s0 + $0x13c] sm:$0xf]
    %v132 = vld [vmem:[%s0 + $0x140] sm:$0xf]
    %v133 = vld [vmem:[%s0 + $0x144] sm:$0xf]
    %v134 = vld [vmem:[%s0 + $0x148] sm:$0xf]
    %v135 = vld [vmem:[%s0 + $0x14c] sm:$0xf]
    %v136 = vld [vmem:[%s0 + $0x150] sm:$0xf]
    %v137 = vld [vmem:[%s0 + $0x154] sm:$0xf]
    %v138 = vld [vmem:[%s0 + $0x158] sm:$0xf]
    %v139 = vld [vmem:[%s0 + $0x15c] sm:$0xf]
    %v140 = vld [vmem:[%s0 + $0x160] sm:$0xf]
    %v141 = vld [vmem:[%s0 + $0x164] sm:$0xf]
    %v142 = vld [vmem:[%s0 + $0x168] sm:$0xf]
    %v143 = vld [vmem:[%s0 + $0x16c] sm:$0xf]
    %v144 = vld [vmem:[%s0 + $0x170] sm:$0xf]
    %v145 = vld [vmem:[%s0 + $0x174] sm:$0xf]
    %v146 = vld [vmem:[%s0 + $0x178] sm:$0xf]
    %v147 = vld [vmem:[%s0 + $0x17c] sm:$0xf]
    %v148 = vld [vmem:[%s0 + $0x180] sm:$0xf]
    %v149 = vld [vmem:[%s0 + $0x184] sm:$0xf]
    %v150 = vld [vmem:[%s0 + $0x188] sm:$0xf]
    %v151 = vld [vmem:[%s0 + $0x18c] sm:$0xf]
    %v152 = vld [vmem:[%s0 + $0x190] sm:$0xf]
    %v153 = vld [vmem:[%s0 + $0x194] sm:$0xf]
    %v154 = vld [vmem:[%s0 + $0x198] sm:$0xf]
    %v155 = vld [vmem:[%s0 + $0x19c] sm:$0xf]
    %v156 = vld [vmem:[%s0 + $0x1a0] sm:$0xf]
    %v157 = vld [vmem:[%s0 + $0x1a4] sm:$0xf]
    %v158 = vld [vmem:[%s0 + $0x1a8] sm:$0xf]
    %v159 = vld [vmem:[%s0 + $0x1ac] sm:$0xf]
    %v160 = vld [vmem:[%s0 + $0x1b0] sm:$0xf]
    %v161 = vld [vmem:[%s0 + $0x1b4] sm:$0xf]
    %v162 = vld [vmem:[%s0 + $0x1b8] sm:$0xf]
    %v163 = vld [vmem:[%s0 + $0x1bc] sm:$0xf]
    %v164 = vld [vmem:[%s0 + $0x1c0] sm:$0xf]
    %v165 = vld [vmem:[%s0 + $0x1c4] sm:$0xf]
    %v166 = vld [vmem:[%s0 + $0x1c8] sm:$0xf]
    %v167 = vld [vmem:[%s0 + $0x1cc] sm:$0xf]
    %v168 = vld [vmem:[%s0 + $0x1d0] sm:$0xf]
    %v169 = vld [vmem:[%s0 + $0x1d4] sm:$0xf]
    %v170 = vld [vmem:[%s0 + $0x1d8] sm:$0xf]
    %v171 = vld [vmem:[%s0 + $0x1dc] sm:$0xf]
    %v172 = vld [vmem:[%s0 + $0x1e0] sm:$0xf]
    %v173 = vld [vmem:[%s0 + $0x1e4] sm:$0xf]
    %v174 = vld [vmem:[%s0 + $0x1e8] sm:$0xf]
    %v175 = vld [vmem:[%s0 + $0x1ec] sm:$0xf]
    %v176 = vld [vmem:[%s0 + $0x1f0] sm:$0xf]
    %v177 = vld [vmem:[%s0 + $0x1f4] sm:$0xf]
    %v178 = vld [vmem:[%s0 + $0x1f8] sm:$0xf]
    %v179 = vld [vmem:[%s0 + $0x1fc] sm:$0xf]
    %v180 = vld [vmem:[%s1] sm:$0xf]
    %v181 = vld [vmem:[%s1 + $0x4] sm:$0xf]
    %v182 = vld [vmem:[%s1 + $0x8] sm:$0xf]
    %v183 = vld [vmem:[%s1 + $0xc] sm:$0x3]
    %v184 = vld [vmem:[%s2] sm:$0x1]
    %v186 = vlaneseq
    %v187 = vshrl.u32 %v186, 7
    %v188 = vsub.s32 0, %v187
    %v189 = vrot.slane %v184, %v188
    %v319 = vunpack.c.l.b16 %v52
    %v320 = vunpack.c.l.b16 %v53
    %v321 = vunpack.c.l.b16 %v54
    %v322 = vunpack.c.l.b16 %v55
    %v323 = vunpack.c.l.b16 %v56
    %v324 = vunpack.c.l.b16 %v57
    %v325 = vunpack.c.l.b16 %v58
    %v326 = vunpack.c.l.b16 %v59
    %v327 = vunpack.c.l.b16 %v60
    %v328 = vunpack.c.l.b16 %v61
    %v329 = vunpack.c.l.b16 %v62
    %v330 = vunpack.c.l.b16 %v63
    %v331 = vunpack.c.l.b16 %v64
    %v332 = vunpack.c.l.b16 %v65
    %v333 = vunpack.c.l.b16 %v66
    %v334 = vunpack.c.l.b16 %v67
    %v335 = vunpack.c.l.b16 %v68
    %v336 = vunpack.c.l.b16 %v69
    %v337 = vunpack.c.l.b16 %v70
    %v338 = vunpack.c.l.b16 %v71
    %v339 = vunpack.c.l.b16 %v72
    %v340 = vunpack.c.l.b16 %v73
    %v341 = vunpack.c.l.b16 %v74
    %v342 = vunpack.c.l.b16 %v75
    %v343 = vunpack.c.l.b16 %v76
    %v344 = vunpack.c.l.b16 %v77
    %v345 = vunpack.c.l.b16 %v78
    %v346 = vunpack.c.l.b16 %v79
    %v347 = vunpack.c.l.b16 %v80
    %v348 = vunpack.c.l.b16 %v81
    %v349 = vunpack.c.l.b16 %v82
    %v350 = vunpack.c.l.b16 %v83
    %v351 = vunpack.c.l.b16 %v84
    %v352 = vunpack.c.l.b16 %v85
    %v353 = vunpack.c.l.b16 %v86
    %v354 = vunpack.c.l.b16 %v87
    %v355 = vunpack.c.l.b16 %v88
    %v356 = vunpack.c.l.b16 %v89
    %v357 = vunpack.c.l.b16 %v90
    %v358 = vunpack.c.l.b16 %v91
    %v359 = vunpack.c.l.b16 %v92
    %v360 = vunpack.c.l.b16 %v93
    %v361 = vunpack.c.l.b16 %v94
    %v362 = vunpack.c.l.b16 %v95
    %v363 = vunpack.c.l.b16 %v96
    %v364 = vunpack.c.l.b16 %v97
    %v365 = vunpack.c.l.b16 %v98
    %v366 = vunpack.c.l.b16 %v99
    %v367 = vunpack.c.l.b16 %v100
    %v368 = vunpack.c.l.b16 %v101
    %v369 = vunpack.c.l.b16 %v102
    %v370 = vunpack.c.l.b16 %v103
    %v371 = vunpack.c.l.b16 %v104
    %v372 = vunpack.c.l.b16 %v105
    %v373 = vunpack.c.l.b16 %v106
    %v374 = vunpack.c.l.b16 %v107
    %v375 = vunpack.c.l.b16 %v108
    %v376 = vunpack.c.l.b16 %v109
    %v377 = vunpack.c.l.b16 %v110
    %v378 = vunpack.c.l.b16 %v111
    %v379 = vunpack.c.l.b16 %v112
    %v380 = vunpack.c.l.b16 %v113
    %v381 = vunpack.c.l.b16 %v114
    %v382 = vunpack.c.l.b16 %v115
    %v383 = vunpack.c.l.b16 %v116
    %v384 = vunpack.c.l.b16 %v117
    %v385 = vunpack.c.l.b16 %v118
    %v386 = vunpack.c.l.b16 %v119
    %v387 = vunpack.c.l.b16 %v120
    %v388 = vunpack.c.l.b16 %v121
    %v389 = vunpack.c.l.b16 %v122
    %v390 = vunpack.c.l.b16 %v123
    %v391 = vunpack.c.l.b16 %v124
    %v392 = vunpack.c.l.b16 %v125
    %v393 = vunpack.c.l.b16 %v126
    %v394 = vunpack.c.l.b16 %v127
    %v395 = vunpack.c.l.b16 %v128
    %v396 = vunpack.c.l.b16 %v129
    %v397 = vunpack.c.l.b16 %v130
    %v398 = vunpack.c.l.b16 %v131
    %v399 = vunpack.c.l.b16 %v132
    %v400 = vunpack.c.l.b16 %v133
    %v401 = vunpack.c.l.b16 %v134
    %v402 = vunpack.c.l.b16 %v135
    %v403 = vunpack.c.l.b16 %v136
    %v404 = vunpack.c.l.b16 %v137
    %v405 = vunpack.c.l.b16 %v138
    %v406 = vunpack.c.l.b16 %v139
    %v407 = vunpack.c.l.b16 %v140
    %v408 = vunpack.c.l.b16 %v141
    %v409 = vunpack.c.l.b16 %v142
    %v410 = vunpack.c.l.b16 %v143
    %v411 = vunpack.c.l.b16 %v144
    %v412 = vunpack.c.l.b16 %v145
    %v413 = vunpack.c.l.b16 %v146
    %v414 = vunpack.c.l.b16 %v147
    %v415 = vunpack.c.l.b16 %v148
    %v416 = vunpack.c.l.b16 %v149
    %v417 = vunpack.c.l.b16 %v150
    %v418 = vunpack.c.l.b16 %v151
    %v419 = vunpack.c.l.b16 %v152
    %v420 = vunpack.c.l.b16 %v153
    %v421 = vunpack.c.l.b16 %v154
    %v422 = vunpack.c.l.b16 %v155
    %v423 = vunpack.c.l.b16 %v156
    %v424 = vunpack.c.l.b16 %v157
    %v425 = vunpack.c.l.b16 %v158
    %v426 = vunpack.c.l.b16 %v159
    %v427 = vunpack.c.l.b16 %v160
    %v428 = vunpack.c.l.b16 %v161
    %v429 = vunpack.c.l.b16 %v162
    %v430 = vunpack.c.l.b16 %v163
    %v431 = vunpack.c.l.b16 %v164
    %v432 = vunpack.c.l.b16 %v165
    %v433 = vunpack.c.l.b16 %v166
    %v434 = vunpack.c.l.b16 %v167
    %v435 = vunpack.c.l.b16 %v168
    %v436 = vunpack.c.l.b16 %v169
    %v437 = vunpack.c.l.b16 %v170
    %v438 = vunpack.c.l.b16 %v171
    %v439 = vunpack.c.l.b16 %v172
    %v440 = vunpack.c.l.b16 %v173
    %v441 = vunpack.c.l.b16 %v174
    %v442 = vunpack.c.l.b16 %v175
    %v443 = vunpack.c.l.b16 %v176
    %v444 = vunpack.c.l.b16 %v177
    %v445 = vunpack.c.l.b16 %v178
    %v446 = vunpack.c.l.b16 %v179
    %v447 = vpack.c.b16 %v320, %v319
    %v448 = vpack.c.b16 %v322, %v321
    %v449 = vpack.c.b16 %v324, %v323
    %v450 = vpack.c.b16 %v326, %v325
    %v451 = vpack.c.b16 %v328, %v327
    %v452 = vpack.c.b16 %v330, %v329
    %v453 = vpack.c.b16 %v332, %v331
    %v454 = vpack.c.b16 %v334, %v333
    %v455 = vpack.c.b16 %v336, %v335
    %v456 = vpack.c.b16 %v338, %v337
    %v457 = vpack.c.b16 %v340, %v339
    %v458 = vpack.c.b16 %v342, %v341
    %v459 = vpack.c.b16 %v344, %v343
    %v460 = vpack.c.b16 %v346, %v345
    %v461 = vpack.c.b16 %v348, %v347
    %v462 = vpack.c.b16 %v350, %v349
    %v463 = vpack.c.b16 %v352, %v351
    %v464 = vpack.c.b16 %v354, %v353
    %v465 = vpack.c.b16 %v356, %v355
    %v466 = vpack.c.b16 %v358, %v357
    %v467 = vpack.c.b16 %v360, %v359
    %v468 = vpack.c.b16 %v362, %v361
    %v469 = vpack.c.b16 %v364, %v363
    %v470 = vpack.c.b16 %v366, %v365
    %v471 = vpack.c.b16 %v368, %v367
    %v472 = vpack.c.b16 %v370, %v369
    %v473 = vpack.c.b16 %v372, %v371
    %v474 = vpack.c.b16 %v374, %v373
    %v475 = vpack.c.b16 %v376, %v375
    %v476 = vpack.c.b16 %v378, %v377
    %v477 = vpack.c.b16 %v380, %v379
    %v478 = vpack.c.b16 %v382, %v381
    %v479 = vpack.c.b16 %v384, %v383
    %v480 = vpack.c.b16 %v386, %v385
    %v481 = vpack.c.b16 %v388, %v387
    %v482 = vpack.c.b16 %v390, %v389
    %v483 = vpack.c.b16 %v392, %v391
    %v484 = vpack.c.b16 %v394, %v393
    %v485 = vpack.c.b16 %v396, %v395
    %v486 = vpack.c.b16 %v398, %v397
    %v487 = vpack.c.b16 %v400, %v399
    %v488 = vpack.c.b16 %v402, %v401
    %v489 = vpack.c.b16 %v404, %v403
    %v490 = vpack.c.b16 %v406, %v405
    %v491 = vpack.c.b16 %v408, %v407
    %v492 = vpack.c.b16 %v410, %v409
    %v493 = vpack.c.b16 %v412, %v411
    %v494 = vpack.c.b16 %v414, %v413
    %v495 = vpack.c.b16 %v416, %v415
    %v496 = vpack.c.b16 %v418, %v417
    %v497 = vpack.c.b16 %v420, %v419
    %v498 = vpack.c.b16 %v422, %v421
    %v499 = vpack.c.b16 %v424, %v423
    %v500 = vpack.c.b16 %v426, %v425
    %v501 = vpack.c.b16 %v428, %v427
    %v502 = vpack.c.b16 %v430, %v429
    %v503 = vpack.c.b16 %v432, %v431
    %v504 = vpack.c.b16 %v434, %v433
    %v505 = vpack.c.b16 %v436, %v435
    %v506 = vpack.c.b16 %v438, %v437
    %v507 = vpack.c.b16 %v440, %v439
    %v508 = vpack.c.b16 %v442, %v441
    %v509 = vpack.c.b16 %v444, %v443
    %v510 = vpack.c.b16 %v446, %v445
    %v515 = vunpack.c.l.b16 %v180
    %v516 = vunpack.c.l.b16 %v181
    %v517 = vunpack.c.l.b16 %v182
    %v518 = vunpack.c.l.b16 %v183
    %v519 = vpack.c.b16 %v516, %v515
    %v520 = vpack.c.b16 %v518, %v517
    %vm522 = vcmask 220160
    %v524 = vsel %vm522, %v447, 0
    %v527 = vsel %vm522, %v448, 0
    %v530 = vsel %vm522, %v449, 0
    %v533 = vsel %vm522, %v450, 0
    %v536 = vsel %vm522, %v451, 0
    %v539 = vsel %vm522, %v452, 0
    %v542 = vsel %vm522, %v453, 0
    %v545 = vsel %vm522, %v454, 0
    %v548 = vsel %vm522, %v455, 0
    %v551 = vsel %vm522, %v456, 0
    %v554 = vsel %vm522, %v457, 0
    %v557 = vsel %vm522, %v458, 0
    %v560 = vsel %vm522, %v459, 0
    %v563 = vsel %vm522, %v460, 0
    %v566 = vsel %vm522, %v461, 0
    %v569 = vsel %vm522, %v462, 0
    %v572 = vsel %vm522, %v463, 0
    %v575 = vsel %vm522, %v464, 0
    %v578 = vsel %vm522, %v465, 0
    %v581 = vsel %vm522, %v466, 0
    %v584 = vsel %vm522, %v467, 0
    %v587 = vsel %vm522, %v468, 0
    %v590 = vsel %vm522, %v469, 0
    %v593 = vsel %vm522, %v470, 0
    %v596 = vsel %vm522, %v471, 0
    %v599 = vsel %vm522, %v472, 0
    %v602 = vsel %vm522, %v473, 0
    %v605 = vsel %vm522, %v474, 0
    %v608 = vsel %vm522, %v475, 0
    %v611 = vsel %vm522, %v476, 0
    %v614 = vsel %vm522, %v477, 0
    %v617 = vsel %vm522, %v478, 0
    %v620 = vsel %vm522, %v479, 0
    %v623 = vsel %vm522, %v480, 0
    %v626 = vsel %vm522, %v481, 0
    %v629 = vsel %vm522, %v482, 0
    %v632 = vsel %vm522, %v483, 0
    %v635 = vsel %vm522, %v484, 0
    %v638 = vsel %vm522, %v485, 0
    %v641 = vsel %vm522, %v486, 0
    %v644 = vsel %vm522, %v487, 0
    %v647 = vsel %vm522, %v488, 0
    %v650 = vsel %vm522, %v489, 0
    %v653 = vsel %vm522, %v490, 0
    %v656 = vsel %vm522, %v491, 0
    %v659 = vsel %vm522, %v492, 0
    %v662 = vsel %vm522, %v493, 0
    %v665 = vsel %vm522, %v494, 0
    %v668 = vsel %vm522, %v495, 0
    %v671 = vsel %vm522, %v496, 0
    %v674 = vsel %vm522, %v497, 0
    %v677 = vsel %vm522, %v498, 0
    %v680 = vsel %vm522, %v499, 0
    %v683 = vsel %vm522, %v500, 0
    %v686 = vsel %vm522, %v501, 0
    %v689 = vsel %vm522, %v502, 0
    %v692 = vsel %vm522, %v503, 0
    %v695 = vsel %vm522, %v504, 0
    %v698 = vsel %vm522, %v505, 0
    %v701 = vsel %vm522, %v506, 0
    %v704 = vsel %vm522, %v507, 0
    %v707 = vsel %vm522, %v508, 0
    %v710 = vsel %vm522, %v509, 0
    %v713 = vsel %vm522, %v510, 0
    %vm715 = vcmask 1044480
    %vm716 = vcmask 1045504
    %v717 = vsel %vm715, 4294967295, 65535
    %v718 = vsel %vm716, %v717, 0
    %v720 = vand.u32 %v520, %v718
    %722 = vmatprep.subr.bf16.mxu0 0
    %723 = vmatpush1.bf16.msra.mxu0 %v519
    %724 = vmatprep.subr.bf16.mxu0 0
    %725 = vmatpush1.bf16.msra.mxu0 %v720
    %726 = vmatprep.subr.bf16.mxu0 0
    %727 = vmatpush1.bf16.msra.mxu0 0
    %728 = vmatprep.subr.bf16.mxu0 0
    %729 = vmatpush1.bf16.msra.mxu0 0
    %730 = vmatprep.subr.bf16.mxu0 0
    %731 = vmatpush1.bf16.msra.mxu0 0
    %732 = vmatprep.subr.bf16.mxu0 0
    %733 = vmatpush1.bf16.msra.mxu0 0
    %734 = vmatprep.subr.bf16.mxu0 0
    %735 = vmatpush1.bf16.msra.mxu0 0
    %736 = vmatprep.subr.bf16.mxu0 0
    %737 = vmatpush1.bf16.msra.mxu0 0
    %738 = vmatprep.subr.bf16.mxu0 0
    %739 = vmatpush1.bf16.msra.mxu0 0
    %740 = vmatprep.subr.bf16.mxu0 0
    %741 = vmatpush1.bf16.msra.mxu0 0
    %742 = vmatprep.subr.bf16.mxu0 0
    %743 = vmatpush1.bf16.msra.mxu0 0
    %744 = vmatprep.subr.bf16.mxu0 0
    %745 = vmatpush1.bf16.msra.mxu0 0
    %746 = vmatprep.subr.bf16.mxu0 0
    %747 = vmatpush1.bf16.msra.mxu0 0
    %748 = vmatprep.subr.bf16.mxu0 0
    %749 = vmatpush1.bf16.msra.mxu0 0
    %750 = vmatprep.subr.bf16.mxu0 0
    %751 = vmatpush1.bf16.msra.mxu0 0
    %752 = vmatprep.subr.bf16.mxu0 0
    %753 = vmatpush1.bf16.msra.mxu0 0
    %754 = vmatprep.mubr.bf16.mxu0 0
    %755 = vmatmul.mubr.bf16.gmra.mrb[0].mxu0 %v524
    %v756 = vpop.f32.mrb[0].mxu0
    %v757 = vadd.f32 %v189, %v756
    %v758 = vpop.f32.mrb[0].mxu0
    %v759 = vpop.f32.mrb[0].mxu0
    %v760 = vadd.f32 %v189, %v759
    %v761 = vpop.f32.mrb[0].mxu0
    %762 = vmatprep.mubr.bf16.mxu0 0
    %763 = vmatmul.mubr.bf16.gmra.mrb[0].mxu0 %v527
    %v764 = vpop.f32.mrb[0].mxu0
    %v765 = vadd.f32 %v189, %v764
    %v766 = vpop.f32.mrb[0].mxu0
    %v767 = vpop.f32.mrb[0].mxu0
    %v768 = vadd.f32 %v189, %v767
    %v769 = vpop.f32.mrb[0].mxu0
    %770 = vmatprep.mubr.bf16.mxu0 0
    %771 = vmatmul.mubr.bf16.gmra.mrb[0].mxu0 %v530
    %v772 = vpop.f32.mrb[0].mxu0
    %v773 = vadd.f32 %v189, %v772
    %v774 = vpop.f32.mrb[0].mxu0
    %v775 = vpop.f32.mrb[0].mxu0
    %v776 = vadd.f32 %v189, %v775
    %v777 = vpop.f32.mrb[0].mxu0
    %778 = vmatprep.mubr.bf16.mxu0 0
    %779 = vmatmul.mubr.bf16.gmra.mrb[0].mxu0 %v533
    %v780 = vpop.f32.mrb[0].mxu0
    %v781 = vadd.f32 %v189, %v780
    %v782 = vpop.f32.mrb[0].mxu0
    %v783 = vpop.f32.mrb[0].mxu0
    %v784 = vadd.f32 %v189, %v783
    %v785 = vpop.f32.mrb[0].mxu0
    %786 = vmatprep.mubr.bf16.mxu0 0
    %787 = vmatmul.mubr.bf16.gmra.mrb[0].mxu0 %v536
    %v788 = vpop.f32.mrb[0].mxu0
    %v789 = vadd.f32 %v189, %v788
    %v790 = vpop.f32.mrb[0].mxu0
    %v791 = vpop.f32.mrb[0].mxu0
    %v792 = vadd.f32 %v189, %v791
    %v793 = vpop.f32.mrb[0].mxu0
    %794 = vmatprep.mubr.bf16.mxu0 0
    %795 = vmatmul.mubr.bf16.gmra.mrb[0].mxu0 %v539
    %v796 = vpop.f32.mrb[0].mxu0
    %v797 = vadd.f32 %v189, %v796
    %v798 = vpop.f32.mrb[0].mxu0
    %v799 = vpop.f32.mrb[0].mxu0
    %v800 = vadd.f32 %v189, %v799
    %v801 = vpop.f32.mrb[0].mxu0
    %802 = vmatprep.mubr.bf16.mxu0 0
    %803 = vmatmul.mubr.bf16.gmra.mrb[0].mxu0 %v542
    %v804 = vpop.f32.mrb[0].mxu0
    %v805 = vadd.f32 %v189, %v804
    %v806 = vpop.f32.mrb[0].mxu0
    %v807 = vpop.f32.mrb[0].mxu0
    %v808 = vadd.f32 %v189, %v807
    %v809 = vpop.f32.mrb[0].mxu0
    %810 = vmatprep.mubr.bf16.mxu0 0
    %811 = vmatmul.mubr.bf16.gmra.mrb[0].mxu0 %v545
    %v812 = vpop.f32.mrb[0].mxu0
    %v813 = vadd.f32 %v189, %v812
    %v814 = vpop.f32.mrb[0].mxu0
    %v815 = vpop.f32.mrb[0].mxu0
    %v816 = vadd.f32 %v189, %v815
    %v817 = vpop.f32.mrb[0].mxu0
    %818 = vmatprep.mubr.bf16.mxu0 0
    %819 = vmatmul.mubr.bf16.gmra.mrb[0].mxu0 %v548
    %v820 = vpop.f32.mrb[0].mxu0
    %v821 = vadd.f32 %v189, %v820
    %v822 = vpop.f32.mrb[0].mxu0
    %v823 = vpop.f32.mrb[0].mxu0
    %v824 = vadd.f32 %v189, %v823
    %v825 = vpop.f32.mrb[0].mxu0
    %826 = vmatprep.mubr.bf16.mxu0 0
    %827 = vmatmul.mubr.bf16.gmra.mrb[0].mxu0 %v551
    %v828 = vpop.f32.mrb[0].mxu0
    %v829 = vadd.f32 %v189, %v828
    %v830 = vpop.f32.mrb[0].mxu0
    %v831 = vpop.f32.mrb[0].mxu0
    %v832 = vadd.f32 %v189, %v831
    %v833 = vpop.f32.mrb[0].mxu0
    %834 = vmatprep.mubr.bf16.mxu0 0
    %835 = vmatmul.mubr.bf16.gmra.mrb[0].mxu0 %v554
    %v836 = vpop.f32.mrb[0].mxu0
    %v837 = vadd.f32 %v189, %v836
    %v838 = vpop.f32.mrb[0].mxu0
    %v839 = vpop.f32.mrb[0].mxu0
    %v840 = vadd.f32 %v189, %v839
    %v841 = vpop.f32.mrb[0].mxu0
    %842 = vmatprep.mubr.bf16.mxu0 0
    %843 = vmatmul.mubr.bf16.gmra.mrb[0].mxu0 %v557
    %v844 = vpop.f32.mrb[0].mxu0
    %v845 = vadd.f32 %v189, %v844
    %v846 = vpop.f32.mrb[0].mxu0
    %v847 = vpop.f32.mrb[0].mxu0
    %v848 = vadd.f32 %v189, %v847
    %v849 = vpop.f32.mrb[0].mxu0
    %850 = vmatprep.mubr.bf16.mxu0 0
    %851 = vmatmul.mubr.bf16.gmra.mrb[0].mxu0 %v560
    %v852 = vpop.f32.mrb[0].mxu0
    %v853 = vadd.f32 %v189, %v852
    %v854 = vpop.f32.mrb[0].mxu0
    %v855 = vpop.f32.mrb[0].mxu0
    %v856 = vadd.f32 %v189, %v855
    %v857 = vpop.f32.mrb[0].mxu0
    %858 = vmatprep.mubr.bf16.mxu0 0
    %859 = vmatmul.mubr.bf16.gmra.mrb[0].mxu0 %v563
    %v860 = vpop.f32.mrb[0].mxu0
    %v861 = vadd.f32 %v189, %v860
    %v862 = vpop.f32.mrb[0].mxu0
    %v863 = vpop.f32.mrb[0].mxu0
    %v864 = vadd.f32 %v189, %v863
    %v865 = vpop.f32.mrb[0].mxu0
    %866 = vmatprep.mubr.bf16.mxu0 0
    %867 = vmatmul.mubr.bf16.gmra.mrb[0].mxu0 %v566
    %v868 = vpop.f32.mrb[0].mxu0
    %v869 = vadd.f32 %v189, %v868
    %v870 = vpop.f32.mrb[0].mxu0
    %v871 = vpop.f32.mrb[0].mxu0
    %v872 = vadd.f32 %v189, %v871
    %v873 = vpop.f32.mrb[0].mxu0
    %874 = vmatprep.mubr.bf16.mxu0 0
    %875 = vmatmul.mubr.bf16.gmra.mrb[0].mxu0 %v569
    %v876 = vpop.f32.mrb[0].mxu0
    %v877 = vadd.f32 %v189, %v876
    %v878 = vpop.f32.mrb[0].mxu0
    %v879 = vpop.f32.mrb[0].mxu0
    %v880 = vadd.f32 %v189, %v879
    %v881 = vpop.f32.mrb[0].mxu0
    %882 = vmatprep.mubr.bf16.mxu0 0
    %883 = vmatmul.mubr.bf16.gmra.mrb[0].mxu0 %v572
    %v884 = vpop.f32.mrb[0].mxu0
    %v885 = vadd.f32 %v189, %v884
    %v886 = vpop.f32.mrb[0].mxu0
    %v887 = vpop.f32.mrb[0].mxu0
    %v888 = vadd.f32 %v189, %v887
    %v889 = vpop.f32.mrb[0].mxu0
    %890 = vmatprep.mubr.bf16.mxu0 0
    %891 = vmatmul.mubr.bf16.gmra.mrb[0].mxu0 %v575
    %v892 = vpop.f32.mrb[0].mxu0
    %v893 = vadd.f32 %v189, %v892
    %v894 = vpop.f32.mrb[0].mxu0
    %v895 = vpop.f32.mrb[0].mxu0
    %v896 = vadd.f32 %v189, %v895
    %v897 = vpop.f32.mrb[0].mxu0
    %898 = vmatprep.mubr.bf16.mxu0 0
    %899 = vmatmul.mubr.bf16.gmra.mrb[0].mxu0 %v578
    %v900 = vpop.f32.mrb[0].mxu0
    %v901 = vadd.f32 %v189, %v900
    %v902 = vpop.f32.mrb[0].mxu0
    %v903 = vpop.f32.mrb[0].mxu0
    %v904 = vadd.f32 %v189, %v903
    %v905 = vpop.f32.mrb[0].mxu0
    %906 = vmatprep.mubr.bf16.mxu0 0
    %907 = vmatmul.mubr.bf16.gmra.mrb[0].mxu0 %v581
    %v908 = vpop.f32.mrb[0].mxu0
    %v909 = vadd.f32 %v189, %v908
    %v910 = vpop.f32.mrb[0].mxu0
    %v911 = vpop.f32.mrb[0].mxu0
    %v912 = vadd.f32 %v189, %v911
    %v913 = vpop.f32.mrb[0].mxu0
    %914 = vmatprep.mubr.bf16.mxu0 0
    %915 = vmatmul.mubr.bf16.gmra.mrb[0].mxu0 %v584
    %v916 = vpop.f32.mrb[0].mxu0
    %v917 = vadd.f32 %v189, %v916
    %v918 = vpop.f32.mrb[0].mxu0
    %v919 = vpop.f32.mrb[0].mxu0
    %v920 = vadd.f32 %v189, %v919
    %v921 = vpop.f32.mrb[0].mxu0
    %922 = vmatprep.mubr.bf16.mxu0 0
    %923 = vmatmul.mubr.bf16.gmra.mrb[0].mxu0 %v587
    %v924 = vpop.f32.mrb[0].mxu0
    %v925 = vadd.f32 %v189, %v924
    %v926 = vpop.f32.mrb[0].mxu0
    %v927 = vpop.f32.mrb[0].mxu0
    %v928 = vadd.f32 %v189, %v927
    %v929 = vpop.f32.mrb[0].mxu0
    %930 = vmatprep.mubr.bf16.mxu0 0
    %931 = vmatmul.mubr.bf16.gmra.mrb[0].mxu0 %v590
    %v932 = vpop.f32.mrb[0].mxu0
    %v933 = vadd.f32 %v189, %v932
    %v934 = vpop.f32.mrb[0].mxu0
    %v935 = vpop.f32.mrb[0].mxu0
    %v936 = vadd.f32 %v189, %v935
    %v937 = vpop.f32.mrb[0].mxu0
    %938 = vmatprep.mubr.bf16.mxu0 0
    %939 = vmatmul.mubr.bf16.gmra.mrb[0].mxu0 %v593
    %v940 = vpop.f32.mrb[0].mxu0
    %v941 = vadd.f32 %v189, %v940
    %v942 = vpop.f32.mrb[0].mxu0
    %v943 = vpop.f32.mrb[0].mxu0
    %v944 = vadd.f32 %v189, %v943
    %v945 = vpop.f32.mrb[0].mxu0
    %946 = vmatprep.mubr.bf16.mxu0 0
    %947 = vmatmul.mubr.bf16.gmra.mrb[0].mxu0 %v596
    %v948 = vpop.f32.mrb[0].mxu0
    %v949 = vadd.f32 %v189, %v948
    %v950 = vpop.f32.mrb[0].mxu0
    %v951 = vpop.f32.mrb[0].mxu0
    %v952 = vadd.f32 %v189, %v951
    %v953 = vpop.f32.mrb[0].mxu0
    %954 = vmatprep.mubr.bf16.mxu0 0
    %955 = vmatmul.mubr.bf16.gmra.mrb[0].mxu0 %v599
    %v956 = vpop.f32.mrb[0].mxu0
    %v957 = vadd.f32 %v189, %v956
    %v958 = vpop.f32.mrb[0].mxu0
    %v959 = vpop.f32.mrb[0].mxu0
    %v960 = vadd.f32 %v189, %v959
    %v961 = vpop.f32.mrb[0].mxu0
    %962 = vmatprep.mubr.bf16.mxu0 0
    %963 = vmatmul.mubr.bf16.gmra.mrb[0].mxu0 %v602
    %v964 = vpop.f32.mrb[0].mxu0
    %v965 = vadd.f32 %v189, %v964
    %v966 = vpop.f32.mrb[0].mxu0
    %v967 = vpop.f32.mrb[0].mxu0
    %v968 = vadd.f32 %v189, %v967
    %v969 = vpop.f32.mrb[0].mxu0
    %970 = vmatprep.mubr.bf16.mxu0 0
    %971 = vmatmul.mubr.bf16.gmra.mrb[0].mxu0 %v605
    %v972 = vpop.f32.mrb[0].mxu0
    %v973 = vadd.f32 %v189, %v972
    %v974 = vpop.f32.mrb[0].mxu0
    %v975 = vpop.f32.mrb[0].mxu0
    %v976 = vadd.f32 %v189, %v975
    %v977 = vpop.f32.mrb[0].mxu0
    %978 = vmatprep.mubr.bf16.mxu0 0
    %979 = vmatmul.mubr.bf16.gmra.mrb[0].mxu0 %v608
    %v980 = vpop.f32.mrb[0].mxu0
    %v981 = vadd.f32 %v189, %v980
    %v982 = vpop.f32.mrb[0].mxu0
    %v983 = vpop.f32.mrb[0].mxu0
    %v984 = vadd.f32 %v189, %v983
    %v985 = vpop.f32.mrb[0].mxu0
    %986 = vmatprep.mubr.bf16.mxu0 0
    %987 = vmatmul.mubr.bf16.gmra.mrb[0].mxu0 %v611
    %v988 = vpop.f32.mrb[0].mxu0
    %v989 = vadd.f32 %v189, %v988
    %v990 = vpop.f32.mrb[0].mxu0
    %v991 = vpop.f32.mrb[0].mxu0
    %v992 = vadd.f32 %v189, %v991
    %v993 = vpop.f32.mrb[0].mxu0
    %994 = vmatprep.mubr.bf16.mxu0 0
    %995 = vmatmul.mubr.bf16.gmra.mrb[0].mxu0 %v614
    %v996 = vpop.f32.mrb[0].mxu0
    %v997 = vadd.f32 %v189, %v996
    %v998 = vpop.f32.mrb[0].mxu0
    %v999 = vpop.f32.mrb[0].mxu0
    %v1000 = vadd.f32 %v189, %v999
    %v1001 = vpop.f32.mrb[0].mxu0
    %1002 = vmatprep.mubr.bf16.mxu0 0
    %1003 = vmatmul.mubr.bf16.gmra.mrb[0].mxu0 %v617
    %v1004 = vpop.f32.mrb[0].mxu0
    %v1005 = vadd.f32 %v189, %v1004
    %v1006 = vpop.f32.mrb[0].mxu0
    %v1007 = vpop.f32.mrb[0].mxu0
    %v1008 = vadd.f32 %v189, %v1007
    %v1009 = vpop.f32.mrb[0].mxu0
    %1010 = vmatprep.mubr.bf16.mxu0 0
    %1011 = vmatmul.mubr.bf16.gmra.mrb[0].mxu0 %v620
    %v1012 = vpop.f32.mrb[0].mxu0
    %v1013 = vadd.f32 %v189, %v1012
    %v1014 = vpop.f32.mrb[0].mxu0
    %v1015 = vpop.f32.mrb[0].mxu0
    %v1016 = vadd.f32 %v189, %v1015
    %v1017 = vpop.f32.mrb[0].mxu0
    %1018 = vmatprep.mubr.bf16.mxu0 0
    %1019 = vmatmul.mubr.bf16.gmra.mrb[0].mxu0 %v623
    %v1020 = vpop.f32.mrb[0].mxu0
    %v1021 = vadd.f32 %v189, %v1020
    %v1022 = vpop.f32.mrb[0].mxu0
    %v1023 = vpop.f32.mrb[0].mxu0
    %v1024 = vadd.f32 %v189, %v1023
    %v1025 = vpop.f32.mrb[0].mxu0
    %1026 = vmatprep.mubr.bf16.mxu0 0
    %1027 = vmatmul.mubr.bf16.gmra.mrb[0].mxu0 %v626
    %v1028 = vpop.f32.mrb[0].mxu0
    %v1029 = vadd.f32 %v189, %v1028
    %v1030 = vpop.f32.mrb[0].mxu0
    %v1031 = vpop.f32.mrb[0].mxu0
    %v1032 = vadd.f32 %v189, %v1031
    %v1033 = vpop.f32.mrb[0].mxu0
    %1034 = vmatprep.mubr.bf16.mxu0 0
    %1035 = vmatmul.mubr.bf16.gmra.mrb[0].mxu0 %v629
    %v1036 = vpop.f32.mrb[0].mxu0
    %v1037 = vadd.f32 %v189, %v1036
    %v1038 = vpop.f32.mrb[0].mxu0
    %v1039 = vpop.f32.mrb[0].mxu0
    %v1040 = vadd.f32 %v189, %v1039
    %v1041 = vpop.f32.mrb[0].mxu0
    %1042 = vmatprep.mubr.bf16.mxu0 0
    %1043 = vmatmul.mubr.bf16.gmra.mrb[0].mxu0 %v632
    %v1044 = vpop.f32.mrb[0].mxu0
    %v1045 = vadd.f32 %v189, %v1044
    %v1046 = vpop.f32.mrb[0].mxu0
    %v1047 = vpop.f32.mrb[0].mxu0
    %v1048 = vadd.f32 %v189, %v1047
    %v1049 = vpop.f32.mrb[0].mxu0
    %1050 = vmatprep.mubr.bf16.mxu0 0
    %1051 = vmatmul.mubr.bf16.gmra.mrb[0].mxu0 %v635
    %v1052 = vpop.f32.mrb[0].mxu0
    %v1053 = vadd.f32 %v189, %v1052
    %v1054 = vpop.f32.mrb[0].mxu0
    %v1055 = vpop.f32.mrb[0].mxu0
    %v1056 = vadd.f32 %v189, %v1055
    %v1057 = vpop.f32.mrb[0].mxu0
    %1058 = vmatprep.mubr.bf16.mxu0 0
    %1059 = vmatmul.mubr.bf16.gmra.mrb[0].mxu0 %v638
    %v1060 = vpop.f32.mrb[0].mxu0
    %v1061 = vadd.f32 %v189, %v1060
    %v1062 = vpop.f32.mrb[0].mxu0
    %v1063 = vpop.f32.mrb[0].mxu0
    %v1064 = vadd.f32 %v189, %v1063
    %v1065 = vpop.f32.mrb[0].mxu0
    %1066 = vmatprep.mubr.bf16.mxu0 0
    %1067 = vmatmul.mubr.bf16.gmra.mrb[0].mxu0 %v641
    %v1068 = vpop.f32.mrb[0].mxu0
    %v1069 = vadd.f32 %v189, %v1068
    %v1070 = vpop.f32.mrb[0].mxu0
    %v1071 = vpop.f32.mrb[0].mxu0
    %v1072 = vadd.f32 %v189, %v1071
    %v1073 = vpop.f32.mrb[0].mxu0
    %1074 = vmatprep.mubr.bf16.mxu0 0
    %1075 = vmatmul.mubr.bf16.gmra.mrb[0].mxu0 %v644
    %v1076 = vpop.f32.mrb[0].mxu0
    %v1077 = vadd.f32 %v189, %v1076
    %v1078 = vpop.f32.mrb[0].mxu0
    %v1079 = vpop.f32.mrb[0].mxu0
    %v1080 = vadd.f32 %v189, %v1079
    %v1081 = vpop.f32.mrb[0].mxu0
    %1082 = vmatprep.mubr.bf16.mxu0 0
    %1083 = vmatmul.mubr.bf16.gmra.mrb[0].mxu0 %v647
    %v1084 = vpop.f32.mrb[0].mxu0
    %v1085 = vadd.f32 %v189, %v1084
    %v1086 = vpop.f32.mrb[0].mxu0
    %v1087 = vpop.f32.mrb[0].mxu0
    %v1088 = vadd.f32 %v189, %v1087
    %v1089 = vpop.f32.mrb[0].mxu0
    %1090 = vmatprep.mubr.bf16.mxu0 0
    %1091 = vmatmul.mubr.bf16.gmra.mrb[0].mxu0 %v650
    %v1092 = vpop.f32.mrb[0].mxu0
    %v1093 = vadd.f32 %v189, %v1092
    %v1094 = vpop.f32.mrb[0].mxu0
    %v1095 = vpop.f32.mrb[0].mxu0
    %v1096 = vadd.f32 %v189, %v1095
    %v1097 = vpop.f32.mrb[0].mxu0
    %1098 = vmatprep.mubr.bf16.mxu0 0
    %1099 = vmatmul.mubr.bf16.gmra.mrb[0].mxu0 %v653
    %v1100 = vpop.f32.mrb[0].mxu0
    %v1101 = vadd.f32 %v189, %v1100
    %v1102 = vpop.f32.mrb[0].mxu0
    %v1103 = vpop.f32.mrb[0].mxu0
    %v1104 = vadd.f32 %v189, %v1103
    %v1105 = vpop.f32.mrb[0].mxu0
    %1106 = vmatprep.mubr.bf16.mxu0 0
    %1107 = vmatmul.mubr.bf16.gmra.mrb[0].mxu0 %v656
    %v1108 = vpop.f32.mrb[0].mxu0
    %v1109 = vadd.f32 %v189, %v1108
    %v1110 = vpop.f32.mrb[0].mxu0
    %v1111 = vpop.f32.mrb[0].mxu0
    %v1112 = vadd.f32 %v189, %v1111
    %v1113 = vpop.f32.mrb[0].mxu0
    %1114 = vmatprep.mubr.bf16.mxu0 0
    %1115 = vmatmul.mubr.bf16.gmra.mrb[0].mxu0 %v659
    %v1116 = vpop.f32.mrb[0].mxu0
    %v1117 = vadd.f32 %v189, %v1116
    %v1118 = vpop.f32.mrb[0].mxu0
    %v1119 = vpop.f32.mrb[0].mxu0
    %v1120 = vadd.f32 %v189, %v1119
    %v1121 = vpop.f32.mrb[0].mxu0
    %1122 = vmatprep.mubr.bf16.mxu0 0
    %1123 = vmatmul.mubr.bf16.gmra.mrb[0].mxu0 %v662
    %v1124 = vpop.f32.mrb[0].mxu0
    %v1125 = vadd.f32 %v189, %v1124
    %v1126 = vpop.f32.mrb[0].mxu0
    %v1127 = vpop.f32.mrb[0].mxu0
    %v1128 = vadd.f32 %v189, %v1127
    %v1129 = vpop.f32.mrb[0].mxu0
    %1130 = vmatprep.mubr.bf16.mxu0 0
    %1131 = vmatmul.mubr.bf16.gmra.mrb[0].mxu0 %v665
    %v1132 = vpop.f32.mrb[0].mxu0
    %v1133 = vadd.f32 %v189, %v1132
    %v1134 = vpop.f32.mrb[0].mxu0
    %v1135 = vpop.f32.mrb[0].mxu0
    %v1136 = vadd.f32 %v189, %v1135
    %v1137 = vpop.f32.mrb[0].mxu0
    %1138 = vmatprep.mubr.bf16.mxu0 0
    %1139 = vmatmul.mubr.bf16.gmra.mrb[0].mxu0 %v668
    %v1140 = vpop.f32.mrb[0].mxu0
    %v1141 = vadd.f32 %v189, %v1140
    %v1142 = vpop.f32.mrb[0].mxu0
    %v1143 = vpop.f32.mrb[0].mxu0
    %v1144 = vadd.f32 %v189, %v1143
    %v1145 = vpop.f32.mrb[0].mxu0
    %1146 = vmatprep.mubr.bf16.mxu0 0
    %1147 = vmatmul.mubr.bf16.gmra.mrb[0].mxu0 %v671
    %v1148 = vpop.f32.mrb[0].mxu0
    %v1149 = vadd.f32 %v189, %v1148
    %v1150 = vpop.f32.mrb[0].mxu0
    %v1151 = vpop.f32.mrb[0].mxu0
    %v1152 = vadd.f32 %v189, %v1151
    %v1153 = vpop.f32.mrb[0].mxu0
    %1154 = vmatprep.mubr.bf16.mxu0 0
    %1155 = vmatmul.mubr.bf16.gmra.mrb[0].mxu0 %v674
    %v1156 = vpop.f32.mrb[0].mxu0
    %v1157 = vadd.f32 %v189, %v1156
    %v1158 = vpop.f32.mrb[0].mxu0
    %v1159 = vpop.f32.mrb[0].mxu0
    %v1160 = vadd.f32 %v189, %v1159
    %v1161 = vpop.f32.mrb[0].mxu0
    %1162 = vmatprep.mubr.bf16.mxu0 0
    %1163 = vmatmul.mubr.bf16.gmra.mrb[0].mxu0 %v677
    %v1164 = vpop.f32.mrb[0].mxu0
    %v1165 = vadd.f32 %v189, %v1164
    %v1166 = vpop.f32.mrb[0].mxu0
    %v1167 = vpop.f32.mrb[0].mxu0
    %v1168 = vadd.f32 %v189, %v1167
    %v1169 = vpop.f32.mrb[0].mxu0
    %1170 = vmatprep.mubr.bf16.mxu0 0
    %1171 = vmatmul.mubr.bf16.gmra.mrb[0].mxu0 %v680
    %v1172 = vpop.f32.mrb[0].mxu0
    %v1173 = vadd.f32 %v189, %v1172
    %v1174 = vpop.f32.mrb[0].mxu0
    %v1175 = vpop.f32.mrb[0].mxu0
    %v1176 = vadd.f32 %v189, %v1175
    %v1177 = vpop.f32.mrb[0].mxu0
    %1178 = vmatprep.mubr.bf16.mxu0 0
    %1179 = vmatmul.mubr.bf16.gmra.mrb[0].mxu0 %v683
    %v1180 = vpop.f32.mrb[0].mxu0
    %v1181 = vadd.f32 %v189, %v1180
    %v1182 = vpop.f32.mrb[0].mxu0
    %v1183 = vpop.f32.mrb[0].mxu0
    %v1184 = vadd.f32 %v189, %v1183
    %v1185 = vpop.f32.mrb[0].mxu0
    %1186 = vmatprep.mubr.bf16.mxu0 0
    %1187 = vmatmul.mubr.bf16.gmra.mrb[0].mxu0 %v686
    %v1188 = vpop.f32.mrb[0].mxu0
    %v1189 = vadd.f32 %v189, %v1188
    %v1190 = vpop.f32.mrb[0].mxu0
    %v1191 = vpop.f32.mrb[0].mxu0
    %v1192 = vadd.f32 %v189, %v1191
    %v1193 = vpop.f32.mrb[0].mxu0
    %1194 = vmatprep.mubr.bf16.mxu0 0
    %1195 = vmatmul.mubr.bf16.gmra.mrb[0].mxu0 %v689
    %v1196 = vpop.f32.mrb[0].mxu0
    %v1197 = vadd.f32 %v189, %v1196
    %v1198 = vpop.f32.mrb[0].mxu0
    %v1199 = vpop.f32.mrb[0].mxu0
    %v1200 = vadd.f32 %v189, %v1199
    %v1201 = vpop.f32.mrb[0].mxu0
    %1202 = vmatprep.mubr.bf16.mxu0 0
    %1203 = vmatmul.mubr.bf16.gmra.mrb[0].mxu0 %v692
    %v1204 = vpop.f32.mrb[0].mxu0
    %v1205 = vadd.f32 %v189, %v1204
    %v1206 = vpop.f32.mrb[0].mxu0
    %v1207 = vpop.f32.mrb[0].mxu0
    %v1208 = vadd.f32 %v189, %v1207
    %v1209 = vpop.f32.mrb[0].mxu0
    %1210 = vmatprep.mubr.bf16.mxu0 0
    %1211 = vmatmul.mubr.bf16.gmra.mrb[0].mxu0 %v695
    %v1212 = vpop.f32.mrb[0].mxu0
    %v1213 = vadd.f32 %v189, %v1212
    %v1214 = vpop.f32.mrb[0].mxu0
    %v1215 = vpop.f32.mrb[0].mxu0
    %v1216 = vadd.f32 %v189, %v1215
    %v1217 = vpop.f32.mrb[0].mxu0
    %1218 = vmatprep.mubr.bf16.mxu0 0
    %1219 = vmatmul.mubr.bf16.gmra.mrb[0].mxu0 %v698
    %v1220 = vpop.f32.mrb[0].mxu0
    %v1221 = vadd.f32 %v189, %v1220
    %v1222 = vpop.f32.mrb[0].mxu0
    %v1223 = vpop.f32.mrb[0].mxu0
    %v1224 = vadd.f32 %v189, %v1223
    %v1225 = vpop.f32.mrb[0].mxu0
    %1226 = vmatprep.mubr.bf16.mxu0 0
    %1227 = vmatmul.mubr.bf16.gmra.mrb[0].mxu0 %v701
    %v1228 = vpop.f32.mrb[0].mxu0
    %v1229 = vadd.f32 %v189, %v1228
    %v1230 = vpop.f32.mrb[0].mxu0
    %v1231 = vpop.f32.mrb[0].mxu0
    %v1232 = vadd.f32 %v189, %v1231
    %v1233 = vpop.f32.mrb[0].mxu0
    %1234 = vmatprep.mubr.bf16.mxu0 0
    %1235 = vmatmul.mubr.bf16.gmra.mrb[0].mxu0 %v704
    %v1236 = vpop.f32.mrb[0].mxu0
    %v1237 = vadd.f32 %v189, %v1236
    %v1238 = vpop.f32.mrb[0].mxu0
    %v1239 = vpop.f32.mrb[0].mxu0
    %v1240 = vadd.f32 %v189, %v1239
    %v1241 = vpop.f32.mrb[0].mxu0
    %1242 = vmatprep.mubr.bf16.mxu0 0
    %1243 = vmatmul.mubr.bf16.gmra.mrb[0].mxu0 %v707
    %v1244 = vpop.f32.mrb[0].mxu0
    %v1245 = vadd.f32 %v189, %v1244
    %v1246 = vpop.f32.mrb[0].mxu0
    %v1247 = vpop.f32.mrb[0].mxu0
    %v1248 = vadd.f32 %v189, %v1247
    %v1249 = vpop.f32.mrb[0].mxu0
    %1250 = vmatprep.mubr.bf16.mxu0 0
    %1251 = vmatmul.mubr.bf16.gmra.mrb[0].mxu0 %v710
    %v1252 = vpop.f32.mrb[0].mxu0
    %v1253 = vadd.f32 %v189, %v1252
    %v1254 = vpop.f32.mrb[0].mxu0
    %v1255 = vpop.f32.mrb[0].mxu0
    %v1256 = vadd.f32 %v189, %v1255
    %v1257 = vpop.f32.mrb[0].mxu0
    %1258 = vmatprep.mubr.bf16.mxu0 0
    %1259 = vmatmul.mubr.bf16.gmra.mrb[0].mxu0 %v713
    %v1260 = vpop.f32.mrb[0].mxu0
    %v1261 = vadd.f32 %v189, %v1260
    %v1262 = vpop.f32.mrb[0].mxu0
    %v1263 = vpop.f32.mrb[0].mxu0
    %v1264 = vadd.f32 %v189, %v1263
    %v1265 = vpop.f32.mrb[0].mxu0
    %1266 = vdwg.mxu0
    %v1267 = vmax.f32 %v757, 0.0
    %v1268 = vmax.f32 %v760, 0.0
    %v1269 = vmax.f32 %v765, 0.0
    %v1270 = vmax.f32 %v768, 0.0
    %v1271 = vmax.f32 %v773, 0.0
    %v1272 = vmax.f32 %v776, 0.0
    %v1273 = vmax.f32 %v781, 0.0
    %v1274 = vmax.f32 %v784, 0.0
    %v1275 = vmax.f32 %v789, 0.0
    %v1276 = vmax.f32 %v792, 0.0
    %v1277 = vmax.f32 %v797, 0.0
    %v1278 = vmax.f32 %v800, 0.0
    %v1279 = vmax.f32 %v805, 0.0
    %v1280 = vmax.f32 %v808, 0.0
    %v1281 = vmax.f32 %v813, 0.0
    %v1282 = vmax.f32 %v816, 0.0
    %v1283 = vmax.f32 %v821, 0.0
    %v1284 = vmax.f32 %v824, 0.0
    %v1285 = vmax.f32 %v829, 0.0
    %v1286 = vmax.f32 %v832, 0.0
    %v1287 = vmax.f32 %v837, 0.0
    %v1288 = vmax.f32 %v840, 0.0
    %v1289 = vmax.f32 %v845, 0.0
    %v1290 = vmax.f32 %v848, 0.0
    %v1291 = vmax.f32 %v853, 0.0
    %v1292 = vmax.f32 %v856, 0.0
    %v1293 = vmax.f32 %v861, 0.0
    %v1294 = vmax.f32 %v864, 0.0
    %v1295 = vmax.f32 %v869, 0.0
    %v1296 = vmax.f32 %v872, 0.0
    %v1297 = vmax.f32 %v877, 0.0
    %v1298 = vmax.f32 %v880, 0.0
    %v1299 = vmax.f32 %v885, 0.0
    %v1300 = vmax.f32 %v888, 0.0
    %v1301 = vmax.f32 %v893, 0.0
    %v1302 = vmax.f32 %v896, 0.0
    %v1303 = vmax.f32 %v901, 0.0
    %v1304 = vmax.f32 %v904, 0.0
    %v1305 = vmax.f32 %v909, 0.0
    %v1306 = vmax.f32 %v912, 0.0
    %v1307 = vmax.f32 %v917, 0.0
    %v1308 = vmax.f32 %v920, 0.0
    %v1309 = vmax.f32 %v925, 0.0
    %v1310 = vmax.f32 %v928, 0.0
    %v1311 = vmax.f32 %v933, 0.0
    %v1312 = vmax.f32 %v936, 0.0
    %v1313 = vmax.f32 %v941, 0.0
    %v1314 = vmax.f32 %v944, 0.0
    %v1315 = vmax.f32 %v949, 0.0
    %v1316 = vmax.f32 %v952, 0.0
    %v1317 = vmax.f32 %v957, 0.0
    %v1318 = vmax.f32 %v960, 0.0
    %v1319 = vmax.f32 %v965, 0.0
    %v1320 = vmax.f32 %v968, 0.0
    %v1321 = vmax.f32 %v973, 0.0
    %v1322 = vmax.f32 %v976, 0.0
    %v1323 = vmax.f32 %v981, 0.0
    %v1324 = vmax.f32 %v984, 0.0
    %v1325 = vmax.f32 %v989, 0.0
    %v1326 = vmax.f32 %v992, 0.0
    %v1327 = vmax.f32 %v997, 0.0
    %v1328 = vmax.f32 %v1000, 0.0
    %v1329 = vmax.f32 %v1005, 0.0
    %v1330 = vmax.f32 %v1008, 0.0
    %v1331 = vmax.f32 %v1013, 0.0
    %v1332 = vmax.f32 %v1016, 0.0
    %v1333 = vmax.f32 %v1021, 0.0
    %v1334 = vmax.f32 %v1024, 0.0
    %v1335 = vmax.f32 %v1029, 0.0
    %v1336 = vmax.f32 %v1032, 0.0
    %v1337 = vmax.f32 %v1037, 0.0
    %v1338 = vmax.f32 %v1040, 0.0
    %v1339 = vmax.f32 %v1045, 0.0
    %v1340 = vmax.f32 %v1048, 0.0
    %v1341 = vmax.f32 %v1053, 0.0
    %v1342 = vmax.f32 %v1056, 0.0
    %v1343 = vmax.f32 %v1061, 0.0
    %v1344 = vmax.f32 %v1064, 0.0
    %v1345 = vmax.f32 %v1069, 0.0
    %v1346 = vmax.f32 %v1072, 0.0
    %v1347 = vmax.f32 %v1077, 0.0
    %v1348 = vmax.f32 %v1080, 0.0
    %v1349 = vmax.f32 %v1085, 0.0
    %v1350 = vmax.f32 %v1088, 0.0
    %v1351 = vmax.f32 %v1093, 0.0
    %v1352 = vmax.f32 %v1096, 0.0
    %v1353 = vmax.f32 %v1101, 0.0
    %v1354 = vmax.f32 %v1104, 0.0
    %v1355 = vmax.f32 %v1109, 0.0
    %v1356 = vmax.f32 %v1112, 0.0
    %v1357 = vmax.f32 %v1117, 0.0
    %v1358 = vmax.f32 %v1120, 0.0
    %v1359 = vmax.f32 %v1125, 0.0
    %v1360 = vmax.f32 %v1128, 0.0
    %v1361 = vmax.f32 %v1133, 0.0
    %v1362 = vmax.f32 %v1136, 0.0
    %v1363 = vmax.f32 %v1141, 0.0
    %v1364 = vmax.f32 %v1144, 0.0
    %v1365 = vmax.f32 %v1149, 0.0
    %v1366 = vmax.f32 %v1152, 0.0
    %v1367 = vmax.f32 %v1157, 0.0
    %v1368 = vmax.f32 %v1160, 0.0
    %v1369 = vmax.f32 %v1165, 0.0
    %v1370 = vmax.f32 %v1168, 0.0
    %v1371 = vmax.f32 %v1173, 0.0
    %v1372 = vmax.f32 %v1176, 0.0
    %v1373 = vmax.f32 %v1181, 0.0
    %v1374 = vmax.f32 %v1184, 0.0
    %v1375 = vmax.f32 %v1189, 0.0
    %v1376 = vmax.f32 %v1192, 0.0
    %v1377 = vmax.f32 %v1197, 0.0
    %v1378 = vmax.f32 %v1200, 0.0
    %v1379 = vmax.f32 %v1205, 0.0
    %v1380 = vmax.f32 %v1208, 0.0
    %v1381 = vmax.f32 %v1213, 0.0
    %v1382 = vmax.f32 %v1216, 0.0
    %v1383 = vmax.f32 %v1221, 0.0
    %v1384 = vmax.f32 %v1224, 0.0
    %v1385 = vmax.f32 %v1229, 0.0
    %v1386 = vmax.f32 %v1232, 0.0
    %v1387 = vmax.f32 %v1237, 0.0
    %v1388 = vmax.f32 %v1240, 0.0
    %v1389 = vmax.f32 %v1245, 0.0
    %v1390 = vmax.f32 %v1248, 0.0
    %v1391 = vmax.f32 %v1253, 0.0
    %v1392 = vmax.f32 %v1256, 0.0
    %v1393 = vmax.f32 %v1261, 0.0
    %v1394 = vmax.f32 %v1264, 0.0
    %v1395 = vadd.f32 %v1267, %v1268
    %v1396 = vadd.f32 %v1395, %v1269
    %v1397 = vadd.f32 %v1396, %v1270
    %v1398 = vadd.f32 %v1397, %v1271
    %v1399 = vadd.f32 %v1398, %v1272
    %v1400 = vadd.f32 %v1399, %v1273
    %v1401 = vadd.f32 %v1400, %v1274
    %v1402 = vadd.f32 %v1401, %v1275
    %v1403 = vadd.f32 %v1402, %v1276
    %v1404 = vadd.f32 %v1403, %v1277
    %v1405 = vadd.f32 %v1404, %v1278
    %v1406 = vadd.f32 %v1405, %v1279
    %v1407 = vadd.f32 %v1406, %v1280
    %v1408 = vadd.f32 %v1407, %v1281
    %v1409 = vadd.f32 %v1408, %v1282
    %v1410 = vadd.f32 %v1409, %v1283
    %v1411 = vadd.f32 %v1410, %v1284
    %v1412 = vadd.f32 %v1411, %v1285
    %v1413 = vadd.f32 %v1412, %v1286
    %v1414 = vadd.f32 %v1413, %v1287
    %v1415 = vadd.f32 %v1414, %v1288
    %v1416 = vadd.f32 %v1415, %v1289
    %v1417 = vadd.f32 %v1416, %v1290
    %v1418 = vadd.f32 %v1417, %v1291
    %v1419 = vadd.f32 %v1418, %v1292
    %v1420 = vadd.f32 %v1419, %v1293
    %v1421 = vadd.f32 %v1420, %v1294
    %v1422 = vadd.f32 %v1421, %v1295
    %v1423 = vadd.f32 %v1422, %v1296
    %v1424 = vadd.f32 %v1423, %v1297
    %v1425 = vadd.f32 %v1424, %v1298
    %v1426 = vrot.slane %v1425, 4
    %v1427 = vadd.f32 %v1425, %v1426
    %v1428 = vrot.slane %v1427, 2
    %v1429 = vadd.f32 %v1427, %v1428
    %v1430 = vrot.slane %v1429, 1
    %v1431 = vadd.f32 %v1429, %v1430
    %v1432 = vadd.f32 %v1299, %v1300
    %v1433 = vadd.f32 %v1432, %v1301
    %v1434 = vadd.f32 %v1433, %v1302
    %v1435 = vadd.f32 %v1434, %v1303
    %v1436 = vadd.f32 %v1435, %v1304
    %v1437 = vadd.f32 %v1436, %v1305
    %v1438 = vadd.f32 %v1437, %v1306
    %v1439 = vadd.f32 %v1438, %v1307
    %v1440 = vadd.f32 %v1439, %v1308
    %v1441 = vadd.f32 %v1440, %v1309
    %v1442 = vadd.f32 %v1441, %v1310
    %v1443 = vadd.f32 %v1442, %v1311
    %v1444 = vadd.f32 %v1443, %v1312
    %v1445 = vadd.f32 %v1444, %v1313
    %v1446 = vadd.f32 %v1445, %v1314
    %v1447 = vadd.f32 %v1446, %v1315
    %v1448 = vadd.f32 %v1447, %v1316
    %v1449 = vadd.f32 %v1448, %v1317
    %v1450 = vadd.f32 %v1449, %v1318
    %v1451 = vadd.f32 %v1450, %v1319
    %v1452 = vadd.f32 %v1451, %v1320
    %v1453 = vadd.f32 %v1452, %v1321
    %v1454 = vadd.f32 %v1453, %v1322
    %v1455 = vadd.f32 %v1454, %v1323
    %v1456 = vadd.f32 %v1455, %v1324
    %v1457 = vadd.f32 %v1456, %v1325
    %v1458 = vadd.f32 %v1457, %v1326
    %v1459 = vadd.f32 %v1458, %v1327
    %v1460 = vadd.f32 %v1459, %v1328
    %v1461 = vadd.f32 %v1460, %v1329
    %v1462 = vadd.f32 %v1461, %v1330
    %v1463 = vrot.slane %v1462, 4
    %v1464 = vadd.f32 %v1462, %v1463
    %v1465 = vrot.slane %v1464, 2
    %v1466 = vadd.f32 %v1464, %v1465
    %v1467 = vrot.slane %v1466, 1
    %v1468 = vadd.f32 %v1466, %v1467
    %v1469 = vadd.f32 %v1331, %v1332
    %v1470 = vadd.f32 %v1469, %v1333
    %v1471 = vadd.f32 %v1470, %v1334
    %v1472 = vadd.f32 %v1471, %v1335
    %v1473 = vadd.f32 %v1472, %v1336
    %v1474 = vadd.f32 %v1473, %v1337
    %v1475 = vadd.f32 %v1474, %v1338
    %v1476 = vadd.f32 %v1475, %v1339
    %v1477 = vadd.f32 %v1476, %v1340
    %v1478 = vadd.f32 %v1477, %v1341
    %v1479 = vadd.f32 %v1478, %v1342
    %v1480 = vadd.f32 %v1479, %v1343
    %v1481 = vadd.f32 %v1480, %v1344
    %v1482 = vadd.f32 %v1481, %v1345
    %v1483 = vadd.f32 %v1482, %v1346
    %v1484 = vadd.f32 %v1483, %v1347
    %v1485 = vadd.f32 %v1484, %v1348
    %v1486 = vadd.f32 %v1485, %v1349
    %v1487 = vadd.f32 %v1486, %v1350
    %v1488 = vadd.f32 %v1487, %v1351
    %v1489 = vadd.f32 %v1488, %v1352
    %v1490 = vadd.f32 %v1489, %v1353
    %v1491 = vadd.f32 %v1490, %v1354
    %v1492 = vadd.f32 %v1491, %v1355
    %v1493 = vadd.f32 %v1492, %v1356
    %v1494 = vadd.f32 %v1493, %v1357
    %v1495 = vadd.f32 %v1494, %v1358
    %v1496 = vadd.f32 %v1495, %v1359
    %v1497 = vadd.f32 %v1496, %v1360
    %v1498 = vadd.f32 %v1497, %v1361
    %v1499 = vadd.f32 %v1498, %v1362
    %v1500 = vrot.slane %v1499, 4
    %v1501 = vadd.f32 %v1499, %v1500
    %v1502 = vrot.slane %v1501, 2
    %v1503 = vadd.f32 %v1501, %v1502
    %v1504 = vrot.slane %v1503, 1
    %v1505 = vadd.f32 %v1503, %v1504
    %v1506 = vadd.f32 %v1363, %v1364
    %v1507 = vadd.f32 %v1506, %v1365
    %v1508 = vadd.f32 %v1507, %v1366
    %v1509 = vadd.f32 %v1508, %v1367
    %v1510 = vadd.f32 %v1509, %v1368
    %v1511 = vadd.f32 %v1510, %v1369
    %v1512 = vadd.f32 %v1511, %v1370
    %v1513 = vadd.f32 %v1512, %v1371
    %v1514 = vadd.f32 %v1513, %v1372
    %v1515 = vadd.f32 %v1514, %v1373
    %v1516 = vadd.f32 %v1515, %v1374
    %v1517 = vadd.f32 %v1516, %v1375
    %v1518 = vadd.f32 %v1517, %v1376
    %v1519 = vadd.f32 %v1518, %v1377
    %v1520 = vadd.f32 %v1519, %v1378
    %v1521 = vadd.f32 %v1520, %v1379
    %v1522 = vadd.f32 %v1521, %v1380
    %v1523 = vadd.f32 %v1522, %v1381
    %v1524 = vadd.f32 %v1523, %v1382
    %v1525 = vadd.f32 %v1524, %v1383
    %v1526 = vadd.f32 %v1525, %v1384
    %v1527 = vadd.f32 %v1526, %v1385
    %v1528 = vadd.f32 %v1527, %v1386
    %v1529 = vadd.f32 %v1528, %v1387
    %v1530 = vadd.f32 %v1529, %v1388
    %v1531 = vadd.f32 %v1530, %v1389
    %v1532 = vadd.f32 %v1531, %v1390
    %v1533 = vadd.f32 %v1532, %v1391
    %v1534 = vadd.f32 %v1533, %v1392
    %v1535 = vadd.f32 %v1534, %v1393
    %v1536 = vadd.f32 %v1535, %v1394
    %v1537 = vrot.slane %v1536, 4
    %v1538 = vadd.f32 %v1536, %v1537
    %v1539 = vrot.slane %v1538, 2
    %v1540 = vadd.f32 %v1538, %v1539
    %v1541 = vrot.slane %v1540, 1
    %v1542 = vadd.f32 %v1540, %v1541
    %v1543 = vmul.f32 %v1431, 0.00390625
    %v1544 = vmul.f32 %v1468, 0.00390625
    %v1545 = vmul.f32 %v1505, 0.00390625
    %v1546 = vmul.f32 %v1542, 0.00390625
    %v1547 = vpack.c.bf16 %v1543, %v1543
    %v1548 = vpack.c.bf16 %v1544, %v1544
    %v1549 = vpack.c.bf16 %v1545, %v1545
    %v1550 = vpack.c.bf16 %v1546, %v1546
    %v1551 = vld [vmem:[%s3] sm:$0xf]
    %v1552 = vld [vmem:[%s3 + $0x4] sm:$0xf]
    %v1553 = vld [vmem:[%s3 + $0x8] sm:$0xf]
    %v1554 = vld [vmem:[%s3 + $0xc] sm:$0xf]
    %v1555 = vld [vmem:[%s3 + $0x10] sm:$0xf]
    %v1556 = vld [vmem:[%s3 + $0x14] sm:$0xf]
    %v1557 = vld [vmem:[%s3 + $0x18] sm:$0xf]
    %v1558 = vld [vmem:[%s3 + $0x1c] sm:$0xf]
    %v1559 = vld [vmem:[%s3 + $0x20] sm:$0xf]
    %v1560 = vld [vmem:[%s3 + $0x24] sm:$0xf]
    %v1561 = vld [vmem:[%s3 + $0x28] sm:$0xf]
    %v1562 = vld [vmem:[%s3 + $0x2c] sm:$0xf]
    %v1563 = vld [vmem:[%s3 + $0x30] sm:$0xf]
    %v1564 = vld [vmem:[%s3 + $0x34] sm:$0xf]
    %v1565 = vld [vmem:[%s3 + $0x38] sm:$0xf]
    %v1566 = vld [vmem:[%s3 + $0x3c] sm:$0xf]
    %v1567 = vld [vmem:[%s4] sm:$0x1]
    %v1569 = vlaneseq
    %v1570 = vshrl.u32 %v1569, 7
    %v1571 = vsub.s32 0, %v1570
    %v1572 = vrot.slane %v1567, %v1571
    %v1578 = vunpack.c.l.b16 %v1547
    %v1579 = vunpack.c.l.b16 %v1548
    %v1580 = vunpack.c.l.b16 %v1549
    %v1581 = vunpack.c.l.b16 %v1550
    %vm1582 = vcmask 1041409
    %v1583 = vsel %vm1582, %v1579, %v1578
    %vm1584 = vcmask 1042434
    %v1585 = vsel %vm1584, %v1580, %v1583
    %vm1586 = vcmask 1043459
    %v1587 = vsel %vm1586, %v1581, %v1585
    %v1588 = vpack.c.b16 %v1587, %v1587
    %v1606 = vunpack.c.l.b16 %v1551
    %v1607 = vunpack.c.l.b16 %v1552
    %v1608 = vunpack.c.l.b16 %v1553
    %v1609 = vunpack.c.l.b16 %v1554
    %v1610 = vunpack.c.l.b16 %v1555
    %v1611 = vunpack.c.l.b16 %v1556
    %v1612 = vunpack.c.l.b16 %v1557
    %v1613 = vunpack.c.l.b16 %v1558
    %v1614 = vunpack.c.l.b16 %v1559
    %v1615 = vunpack.c.l.b16 %v1560
    %v1616 = vunpack.c.l.b16 %v1561
    %v1617 = vunpack.c.l.b16 %v1562
    %v1618 = vunpack.c.l.b16 %v1563
    %v1619 = vunpack.c.l.b16 %v1564
    %v1620 = vunpack.c.l.b16 %v1565
    %v1621 = vunpack.c.l.b16 %v1566
    %v1622 = vpack.c.b16 %v1607, %v1606
    %v1623 = vpack.c.b16 %v1609, %v1608
    %v1624 = vpack.c.b16 %v1611, %v1610
    %v1625 = vpack.c.b16 %v1613, %v1612
    %v1626 = vpack.c.b16 %v1615, %v1614
    %v1627 = vpack.c.b16 %v1617, %v1616
    %v1628 = vpack.c.b16 %v1619, %v1618
    %v1629 = vpack.c.b16 %v1621, %v1620
    %1638 = vmatprep.subr.bf16.mxu0 0
    %1639 = vmatpush1.bf16.msra.mxu0 %v1622
    %1640 = vmatprep.subr.bf16.mxu0 0
    %1641 = vmatpush1.bf16.msra.mxu0 %v1623
    %1642 = vmatprep.subr.bf16.mxu0 0
    %1643 = vmatpush1.bf16.msra.mxu0 %v1624
    %1644 = vmatprep.subr.bf16.mxu0 0
    %1645 = vmatpush1.bf16.msra.mxu0 %v1625
    %1646 = vmatprep.subr.bf16.mxu0 0
    %1647 = vmatpush1.bf16.msra.mxu0 %v1626
    %1648 = vmatprep.subr.bf16.mxu0 0
    %1649 = vmatpush1.bf16.msra.mxu0 %v1627
    %1650 = vmatprep.subr.bf16.mxu0 0
    %1651 = vmatpush1.bf16.msra.mxu0 %v1628
    %1652 = vmatprep.subr.bf16.mxu0 0
    %1653 = vmatpush1.bf16.msra.mxu0 %v1629
    %1654 = vmatprep.subr.bf16.mxu0 0
    %1655 = vmatpush1.bf16.msra.mxu0 0
    %1656 = vmatprep.subr.bf16.mxu0 0
    %1657 = vmatpush1.bf16.msra.mxu0 0
    %1658 = vmatprep.subr.bf16.mxu0 0
    %1659 = vmatpush1.bf16.msra.mxu0 0
    %1660 = vmatprep.subr.bf16.mxu0 0
    %1661 = vmatpush1.bf16.msra.mxu0 0
    %1662 = vmatprep.subr.bf16.mxu0 0
    %1663 = vmatpush1.bf16.msra.mxu0 0
    %1664 = vmatprep.subr.bf16.mxu0 0
    %1665 = vmatpush1.bf16.msra.mxu0 0
    %1666 = vmatprep.subr.bf16.mxu0 0
    %1667 = vmatpush1.bf16.msra.mxu0 0
    %1668 = vmatprep.subr.bf16.mxu0 0
    %1669 = vmatpush1.bf16.msra.mxu0 0
    %1670 = vmatprep.mubr.bf16.mxu0 0
    %1671 = vmatmul.mubr.bf16.gmra.mrb[0].mxu0 %v1588
    %v1672 = vpop.f32.mrb[0].mxu0
    %v1673 = vadd.f32 %v1572, %v1672
    %v1674 = vpop.f32.mrb[0].mxu0
    %v1675 = vpop.f32.mrb[0].mxu0
    %v1676 = vpop.f32.mrb[0].mxu0
    %1677 = vdwg.mxu0
    %v1678 = vlaneseq
    %v1679 = vshrl.u32 %v1678, 7
    %vm1680 = vcmp.lt.s32.totalorder %v1679, 2
    %v1681 = vsel %vm1680, 1, 0
    %v1682 = vcvt.s32.f32 %v1681
    %v1683 = vsub.f32 1.0, %v1682
    %v1684 = vmul.f32 %v1673, %v1682
    %vm1685 = vcmask 1043456
    %v1686 = vsel %vm1685, %v1684, 0.0
    %v1687 = vrot.slane %v1686, 4
    %v1688 = vadd.f32 %v1686, %v1687
    %v1689 = vrot.slane %v1688, 2
    %v1690 = vadd.f32 %v1688, %v1689
    %v1691 = vrot.slane %v1690, 1
    %v1692 = vadd.f32 %v1690, %v1691
    %v1693 = vmul.f32 %v1692, 0.5
    %v1694 = vmul.f32 %v1673, %v1683
    %v1695 = vsel %vm1685, %v1694, 0.0
    %v1696 = vrot.slane %v1695, 4
    %v1697 = vadd.f32 %v1695, %v1696
    %v1698 = vrot.slane %v1697, 2
    %v1699 = vadd.f32 %v1697, %v1698
    %v1700 = vrot.slane %v1699, 1
    %v1701 = vadd.f32 %v1699, %v1700
    %v1702 = vmul.f32 %v1701, 0.5
    %v1703 = vmul.f32 %v1682, %v1693
    %v1704 = vmul.f32 %v1683, %v1702
    %v1705 = vadd.f32 %v1703, %v1704
    %v1706 = vsub.f32 %v1673, %v1705
    %v1707 = vmul.f32 %v1706, %v1706
    %v1708 = vmul.f32 %v1707, %v1682
    %v1709 = vsel %vm1685, %v1708, 0.0
    %v1710 = vrot.slane %v1709, 4
    %v1711 = vadd.f32 %v1709, %v1710
    %v1712 = vrot.slane %v1711, 2
    %v1713 = vadd.f32 %v1711, %v1712
    %v1714 = vrot.slane %v1713, 1
    %v1715 = vadd.f32 %v1713, %v1714
    %v1716 = vmul.f32 %v1715, 0.5
    %v1717 = vmul.f32 %v1707, %v1683
    %v1718 = vsel %vm1685, %v1717, 0.0
    %v1719 = vrot.slane %v1718, 4
    %v1720 = vadd.f32 %v1718, %v1719
    %v1721 = vrot.slane %v1720, 2
    %v1722 = vadd.f32 %v1720, %v1721
    %v1723 = vrot.slane %v1722, 1
    %v1724 = vadd.f32 %v1722, %v1723
    %v1725 = vmul.f32 %v1724, 0.5
    %v1726 = vmul.f32 %v1682, %v1716
    %v1727 = vmul.f32 %v1683, %v1725
    %v1728 = vadd.f32 %v1726, %v1727
    %v1729 = vadd.f32 %v1728, 1e-05
    %v1730 = vrsqrt.pop %v1729
    %v1731 = vmul.f32 %v1706, %v1730
    %v1732 = vld [vmem:[%s5] sm:$0x1]
    %v1734 = vlaneseq
    %v1735 = vshrl.u32 %v1734, 7
    %v1736 = vsub.s32 0, %v1735
    %v1737 = vrot.slane %v1732, %v1736
    %v1739 = vmul.f32 %v1731, %v1737
    %v1740 = vld [vmem:[%s6] sm:$0x1]
    %v1742 = vlaneseq
    %v1743 = vshrl.u32 %v1742, 7
    %v1744 = vsub.s32 0, %v1743
    %v1745 = vrot.slane %v1740, %v1744
    %v1747 = vadd.f32 %v1739, %v1745
    %v1748 = vmax.f32 %v1747, 0.0
    %v1749 = vpack.c.bf16 %v1748, %v1748
    %v1750 = vld [vmem:[%s7] sm:$0xf]
    %v1751 = vld [vmem:[%s7 + $0x4] sm:$0xf]
    %v1752 = vld [vmem:[%s7 + $0x8] sm:$0xf]
    %v1753 = vld [vmem:[%s7 + $0xc] sm:$0xf]
    %v1754 = vld [vmem:[%s7 + $0x10] sm:$0xf]
    %v1755 = vld [vmem:[%s7 + $0x14] sm:$0xf]
    %v1756 = vld [vmem:[%s7 + $0x18] sm:$0xf]
    %v1757 = vld [vmem:[%s7 + $0x1c] sm:$0xf]
    %v1758 = vld [vmem:[%s7 + $0x20] sm:$0xf]
    %v1759 = vld [vmem:[%s7 + $0x24] sm:$0xf]
    %v1760 = vld [vmem:[%s7 + $0x28] sm:$0xf]
    %v1761 = vld [vmem:[%s7 + $0x2c] sm:$0xf]
    %v1762 = vld [vmem:[%s7 + $0x30] sm:$0xf]
    %v1763 = vld [vmem:[%s7 + $0x34] sm:$0xf]
    %v1764 = vld [vmem:[%s7 + $0x38] sm:$0xf]
    %v1765 = vld [vmem:[%s7 + $0x3c] sm:$0xf]
    %v1766 = vld [vmem:[%s8] sm:$0x1]
    %v1768 = vlaneseq
    %v1769 = vshrl.u32 %v1768, 7
    %v1770 = vsub.s32 0, %v1769
    %v1771 = vrot.slane %v1766, %v1770
    %v1789 = vunpack.c.l.b16 %v1750
    %v1790 = vunpack.c.l.b16 %v1751
    %v1791 = vunpack.c.l.b16 %v1752
    %v1792 = vunpack.c.l.b16 %v1753
    %v1793 = vunpack.c.l.b16 %v1754
    %v1794 = vunpack.c.l.b16 %v1755
    %v1795 = vunpack.c.l.b16 %v1756
    %v1796 = vunpack.c.l.b16 %v1757
    %v1797 = vunpack.c.l.b16 %v1758
    %v1798 = vunpack.c.l.b16 %v1759
    %v1799 = vunpack.c.l.b16 %v1760
    %v1800 = vunpack.c.l.b16 %v1761
    %v1801 = vunpack.c.l.b16 %v1762
    %v1802 = vunpack.c.l.b16 %v1763
    %v1803 = vunpack.c.l.b16 %v1764
    %v1804 = vunpack.c.l.b16 %v1765
    %v1805 = vpack.c.b16 %v1790, %v1789
    %v1806 = vpack.c.b16 %v1792, %v1791
    %v1807 = vpack.c.b16 %v1794, %v1793
    %v1808 = vpack.c.b16 %v1796, %v1795
    %v1809 = vpack.c.b16 %v1798, %v1797
    %v1810 = vpack.c.b16 %v1800, %v1799
    %v1811 = vpack.c.b16 %v1802, %v1801
    %v1812 = vpack.c.b16 %v1804, %v1803
    %1821 = vmatprep.subr.bf16.mxu0 0
    %1822 = vmatpush1.bf16.msra.mxu0 %v1805
    %1823 = vmatprep.subr.bf16.mxu0 0
    %1824 = vmatpush1.bf16.msra.mxu0 %v1806
    %1825 = vmatprep.subr.bf16.mxu0 0
    %1826 = vmatpush1.bf16.msra.mxu0 %v1807
    %1827 = vmatprep.subr.bf16.mxu0 0
    %1828 = vmatpush1.bf16.msra.mxu0 %v1808
    %1829 = vmatprep.subr.bf16.mxu0 0
    %1830 = vmatpush1.bf16.msra.mxu0 %v1809
    %1831 = vmatprep.subr.bf16.mxu0 0
    %1832 = vmatpush1.bf16.msra.mxu0 %v1810
    %1833 = vmatprep.subr.bf16.mxu0 0
    %1834 = vmatpush1.bf16.msra.mxu0 %v1811
    %1835 = vmatprep.subr.bf16.mxu0 0
    %1836 = vmatpush1.bf16.msra.mxu0 %v1812
    %1837 = vmatprep.subr.bf16.mxu0 0
    %1838 = vmatpush1.bf16.msra.mxu0 0
    %1839 = vmatprep.subr.bf16.mxu0 0
    %1840 = vmatpush1.bf16.msra.mxu0 0
    %1841 = vmatprep.subr.bf16.mxu0 0
    %1842 = vmatpush1.bf16.msra.mxu0 0
    %1843 = vmatprep.subr.bf16.mxu0 0
    %1844 = vmatpush1.bf16.msra.mxu0 0
    %1845 = vmatprep.subr.bf16.mxu0 0
    %1846 = vmatpush1.bf16.msra.mxu0 0
    %1847 = vmatprep.subr.bf16.mxu0 0
    %1848 = vmatpush1.bf16.msra.mxu0 0
    %1849 = vmatprep.subr.bf16.mxu0 0
    %1850 = vmatpush1.bf16.msra.mxu0 0
    %1851 = vmatprep.subr.bf16.mxu0 0
    %1852 = vmatpush1.bf16.msra.mxu0 0
    %1853 = vmatprep.mubr.bf16.mxu0 0
    %1854 = vmatmul.mubr.bf16.gmra.mrb[0].mxu0 %v1749
    %v1855 = vpop.f32.mrb[0].mxu0
    %v1856 = vadd.f32 %v1771, %v1855
    %v1857 = vpop.f32.mrb[0].mxu0
    %v1858 = vpop.f32.mrb[0].mxu0
    %v1859 = vpop.f32.mrb[0].mxu0
    %1860 = vdwg.mxu0
    %v1861 = vpack.c.bf16 %v1856, %v1856
    %v1862 = vld [vmem:[%s9] sm:$0xf]
    %v1863 = vld [vmem:[%s9 + $0x4] sm:$0xf]
    %v1864 = vld [vmem:[%s9 + $0x8] sm:$0xf]
    %v1865 = vld [vmem:[%s9 + $0xc] sm:$0xf]
    %v1866 = vld [vmem:[%s9 + $0x10] sm:$0xf]
    %v1867 = vld [vmem:[%s9 + $0x14] sm:$0xf]
    %v1868 = vld [vmem:[%s9 + $0x18] sm:$0xf]
    %v1869 = vld [vmem:[%s9 + $0x1c] sm:$0xf]
    %v1870 = vld [vmem:[%s9 + $0x20] sm:$0xf]
    %v1871 = vld [vmem:[%s9 + $0x24] sm:$0xf]
    %v1872 = vld [vmem:[%s9 + $0x28] sm:$0xf]
    %v1873 = vld [vmem:[%s9 + $0x2c] sm:$0xf]
    %v1874 = vld [vmem:[%s9 + $0x30] sm:$0xf]
    %v1875 = vld [vmem:[%s9 + $0x34] sm:$0xf]
    %v1876 = vld [vmem:[%s9 + $0x38] sm:$0xf]
    %v1877 = vld [vmem:[%s9 + $0x3c] sm:$0xf]
    %v1878 = vld [vmem:[%s10] sm:$0x1]
    %v1880 = vlaneseq
    %v1881 = vshrl.u32 %v1880, 7
    %v1882 = vsub.s32 0, %v1881
    %v1883 = vrot.slane %v1878, %v1882
    %v1901 = vunpack.c.l.b16 %v1862
    %v1902 = vunpack.c.l.b16 %v1863
    %v1903 = vunpack.c.l.b16 %v1864
    %v1904 = vunpack.c.l.b16 %v1865
    %v1905 = vunpack.c.l.b16 %v1866
    %v1906 = vunpack.c.l.b16 %v1867
    %v1907 = vunpack.c.l.b16 %v1868
    %v1908 = vunpack.c.l.b16 %v1869
    %v1909 = vunpack.c.l.b16 %v1870
    %v1910 = vunpack.c.l.b16 %v1871
    %v1911 = vunpack.c.l.b16 %v1872
    %v1912 = vunpack.c.l.b16 %v1873
    %v1913 = vunpack.c.l.b16 %v1874
    %v1914 = vunpack.c.l.b16 %v1875
    %v1915 = vunpack.c.l.b16 %v1876
    %v1916 = vunpack.c.l.b16 %v1877
    %v1917 = vpack.c.b16 %v1902, %v1901
    %v1918 = vpack.c.b16 %v1904, %v1903
    %v1919 = vpack.c.b16 %v1906, %v1905
    %v1920 = vpack.c.b16 %v1908, %v1907
    %v1921 = vpack.c.b16 %v1910, %v1909
    %v1922 = vpack.c.b16 %v1912, %v1911
    %v1923 = vpack.c.b16 %v1914, %v1913
    %v1924 = vpack.c.b16 %v1916, %v1915
    %1933 = vmatprep.subr.bf16.mxu0 0
    %1934 = vmatpush1.bf16.msra.mxu0 %v1917
    %1935 = vmatprep.subr.bf16.mxu0 0
    %1936 = vmatpush1.bf16.msra.mxu0 %v1918
    %1937 = vmatprep.subr.bf16.mxu0 0
    %1938 = vmatpush1.bf16.msra.mxu0 %v1919
    %1939 = vmatprep.subr.bf16.mxu0 0
    %1940 = vmatpush1.bf16.msra.mxu0 %v1920
    %1941 = vmatprep.subr.bf16.mxu0 0
    %1942 = vmatpush1.bf16.msra.mxu0 %v1921
    %1943 = vmatprep.subr.bf16.mxu0 0
    %1944 = vmatpush1.bf16.msra.mxu0 %v1922
    %1945 = vmatprep.subr.bf16.mxu0 0
    %1946 = vmatpush1.bf16.msra.mxu0 %v1923
    %1947 = vmatprep.subr.bf16.mxu0 0
    %1948 = vmatpush1.bf16.msra.mxu0 %v1924
    %1949 = vmatprep.subr.bf16.mxu0 0
    %1950 = vmatpush1.bf16.msra.mxu0 0
    %1951 = vmatprep.subr.bf16.mxu0 0
    %1952 = vmatpush1.bf16.msra.mxu0 0
    %1953 = vmatprep.subr.bf16.mxu0 0
    %1954 = vmatpush1.bf16.msra.mxu0 0
    %1955 = vmatprep.subr.bf16.mxu0 0
    %1956 = vmatpush1.bf16.msra.mxu0 0
    %1957 = vmatprep.subr.bf16.mxu0 0
    %1958 = vmatpush1.bf16.msra.mxu0 0
    %1959 = vmatprep.subr.bf16.mxu0 0
    %1960 = vmatpush1.bf16.msra.mxu0 0
    %1961 = vmatprep.subr.bf16.mxu0 0
    %1962 = vmatpush1.bf16.msra.mxu0 0
    %1963 = vmatprep.subr.bf16.mxu0 0
    %1964 = vmatpush1.bf16.msra.mxu0 0
    %1965 = vmatprep.mubr.bf16.mxu0 0
    %1966 = vmatmul.mubr.bf16.gmra.mrb[0].mxu0 %v1861
    %v1967 = vpop.f32.mrb[0].mxu0
    %v1968 = vadd.f32 %v1883, %v1967
    %v1969 = vpop.f32.mrb[0].mxu0
    %v1970 = vpop.f32.mrb[0].mxu0
    %v1971 = vpop.f32.mrb[0].mxu0
    %1972 = vdwg.mxu0
    %v1973 = vmul.f32 %v1968, %v1682
    %v1974 = vsel %vm1685, %v1973, 0.0
    %v1975 = vrot.slane %v1974, 4
    %v1976 = vadd.f32 %v1974, %v1975
    %v1977 = vrot.slane %v1976, 2
    %v1978 = vadd.f32 %v1976, %v1977
    %v1979 = vrot.slane %v1978, 1
    %v1980 = vadd.f32 %v1978, %v1979
    %v1981 = vmul.f32 %v1980, 0.5
    %v1982 = vmul.f32 %v1968, %v1683
    %v1983 = vsel %vm1685, %v1982, 0.0
    %v1984 = vrot.slane %v1983, 4
    %v1985 = vadd.f32 %v1983, %v1984
    %v1986 = vrot.slane %v1985, 2
    %v1987 = vadd.f32 %v1985, %v1986
    %v1988 = vrot.slane %v1987, 1
    %v1989 = vadd.f32 %v1987, %v1988
    %v1990 = vmul.f32 %v1989, 0.5
    %v1991 = vmul.f32 %v1682, %v1981
    %v1992 = vmul.f32 %v1683, %v1990
    %v1993 = vadd.f32 %v1991, %v1992
    %v1994 = vsub.f32 %v1968, %v1993
    %v1995 = vmul.f32 %v1994, %v1994
    %v1996 = vmul.f32 %v1995, %v1682
    %v1997 = vsel %vm1685, %v1996, 0.0
    %v1998 = vrot.slane %v1997, 4
    %v1999 = vadd.f32 %v1997, %v1998
    %v2000 = vrot.slane %v1999, 2
    %v2001 = vadd.f32 %v1999, %v2000
    %v2002 = vrot.slane %v2001, 1
    %v2003 = vadd.f32 %v2001, %v2002
    %v2004 = vmul.f32 %v2003, 0.5
    %v2005 = vmul.f32 %v1995, %v1683
    %v2006 = vsel %vm1685, %v2005, 0.0
    %v2007 = vrot.slane %v2006, 4
    %v2008 = vadd.f32 %v2006, %v2007
    %v2009 = vrot.slane %v2008, 2
    %v2010 = vadd.f32 %v2008, %v2009
    %v2011 = vrot.slane %v2010, 1
    %v2012 = vadd.f32 %v2010, %v2011
    %v2013 = vmul.f32 %v2012, 0.5
    %v2014 = vmul.f32 %v1682, %v2004
    %v2015 = vmul.f32 %v1683, %v2013
    %v2016 = vadd.f32 %v2014, %v2015
    %v2017 = vadd.f32 %v2016, 1e-05
    %v2018 = vrsqrt.pop %v2017
    %v2019 = vmul.f32 %v1994, %v2018
    %v2020 = vld [vmem:[%s11] sm:$0x1]
    %v2022 = vlaneseq
    %v2023 = vshrl.u32 %v2022, 7
    %v2024 = vsub.s32 0, %v2023
    %v2025 = vrot.slane %v2020, %v2024
    %v2027 = vmul.f32 %v2019, %v2025
    %v2028 = vld [vmem:[%s12] sm:$0x1]
    %v2030 = vlaneseq
    %v2031 = vshrl.u32 %v2030, 7
    %v2032 = vsub.s32 0, %v2031
    %v2033 = vrot.slane %v2028, %v2032
    %v2035 = vadd.f32 %v2027, %v2033
    %v2036 = vmax.f32 %v2035, 0.0
    %v2037 = vpack.c.bf16 %v2036, %v2036
    %v2038 = vld [vmem:[%s13] sm:$0xf]
    %v2039 = vld [vmem:[%s13 + $0x4] sm:$0xf]
    %v2040 = vld [vmem:[%s13 + $0x8] sm:$0xf]
    %v2041 = vld [vmem:[%s13 + $0xc] sm:$0xf]
    %v2042 = vld [vmem:[%s13 + $0x10] sm:$0xf]
    %v2043 = vld [vmem:[%s13 + $0x14] sm:$0xf]
    %v2044 = vld [vmem:[%s13 + $0x18] sm:$0xf]
    %v2045 = vld [vmem:[%s13 + $0x1c] sm:$0xf]
    %v2046 = vld [vmem:[%s13 + $0x20] sm:$0xf]
    %v2047 = vld [vmem:[%s13 + $0x24] sm:$0xf]
    %v2048 = vld [vmem:[%s13 + $0x28] sm:$0xf]
    %v2049 = vld [vmem:[%s13 + $0x2c] sm:$0xf]
    %v2050 = vld [vmem:[%s13 + $0x30] sm:$0xf]
    %v2051 = vld [vmem:[%s13 + $0x34] sm:$0xf]
    %v2052 = vld [vmem:[%s13 + $0x38] sm:$0xf]
    %v2053 = vld [vmem:[%s13 + $0x3c] sm:$0xf]
    %v2054 = vld [vmem:[%s14] sm:$0x1]
    %v2056 = vlaneseq
    %v2057 = vshrl.u32 %v2056, 7
    %v2058 = vsub.s32 0, %v2057
    %v2059 = vrot.slane %v2054, %v2058
    %v2077 = vunpack.c.l.b16 %v2038
    %v2078 = vunpack.c.l.b16 %v2039
    %v2079 = vunpack.c.l.b16 %v2040
    %v2080 = vunpack.c.l.b16 %v2041
    %v2081 = vunpack.c.l.b16 %v2042
    %v2082 = vunpack.c.l.b16 %v2043
    %v2083 = vunpack.c.l.b16 %v2044
    %v2084 = vunpack.c.l.b16 %v2045
    %v2085 = vunpack.c.l.b16 %v2046
    %v2086 = vunpack.c.l.b16 %v2047
    %v2087 = vunpack.c.l.b16 %v2048
    %v2088 = vunpack.c.l.b16 %v2049
    %v2089 = vunpack.c.l.b16 %v2050
    %v2090 = vunpack.c.l.b16 %v2051
    %v2091 = vunpack.c.l.b16 %v2052
    %v2092 = vunpack.c.l.b16 %v2053
    %v2093 = vpack.c.b16 %v2078, %v2077
    %v2094 = vpack.c.b16 %v2080, %v2079
    %v2095 = vpack.c.b16 %v2082, %v2081
    %v2096 = vpack.c.b16 %v2084, %v2083
    %v2097 = vpack.c.b16 %v2086, %v2085
    %v2098 = vpack.c.b16 %v2088, %v2087
    %v2099 = vpack.c.b16 %v2090, %v2089
    %v2100 = vpack.c.b16 %v2092, %v2091
    %2109 = vmatprep.subr.bf16.mxu0 0
    %2110 = vmatpush1.bf16.msra.mxu0 %v2093
    %2111 = vmatprep.subr.bf16.mxu0 0
    %2112 = vmatpush1.bf16.msra.mxu0 %v2094
    %2113 = vmatprep.subr.bf16.mxu0 0
    %2114 = vmatpush1.bf16.msra.mxu0 %v2095
    %2115 = vmatprep.subr.bf16.mxu0 0
    %2116 = vmatpush1.bf16.msra.mxu0 %v2096
    %2117 = vmatprep.subr.bf16.mxu0 0
    %2118 = vmatpush1.bf16.msra.mxu0 %v2097
    %2119 = vmatprep.subr.bf16.mxu0 0
    %2120 = vmatpush1.bf16.msra.mxu0 %v2098
    %2121 = vmatprep.subr.bf16.mxu0 0
    %2122 = vmatpush1.bf16.msra.mxu0 %v2099
    %2123 = vmatprep.subr.bf16.mxu0 0
    %2124 = vmatpush1.bf16.msra.mxu0 %v2100
    %2125 = vmatprep.subr.bf16.mxu0 0
    %2126 = vmatpush1.bf16.msra.mxu0 0
    %2127 = vmatprep.subr.bf16.mxu0 0
    %2128 = vmatpush1.bf16.msra.mxu0 0
    %2129 = vmatprep.subr.bf16.mxu0 0
    %2130 = vmatpush1.bf16.msra.mxu0 0
    %2131 = vmatprep.subr.bf16.mxu0 0
    %2132 = vmatpush1.bf16.msra.mxu0 0
    %2133 = vmatprep.subr.bf16.mxu0 0
    %2134 = vmatpush1.bf16.msra.mxu0 0
    %2135 = vmatprep.subr.bf16.mxu0 0
    %2136 = vmatpush1.bf16.msra.mxu0 0
    %2137 = vmatprep.subr.bf16.mxu0 0
    %2138 = vmatpush1.bf16.msra.mxu0 0
    %2139 = vmatprep.subr.bf16.mxu0 0
    %2140 = vmatpush1.bf16.msra.mxu0 0
    %2141 = vmatprep.mubr.bf16.mxu0 0
    %2142 = vmatmul.mubr.bf16.gmra.mrb[0].mxu0 %v2037
    %v2143 = vpop.f32.mrb[0].mxu0
    %v2144 = vadd.f32 %v2059, %v2143
    %v2145 = vpop.f32.mrb[0].mxu0
    %v2146 = vpop.f32.mrb[0].mxu0
    %v2147 = vpop.f32.mrb[0].mxu0
    %2148 = vdwg.mxu0
    %v2149 = vmul.f32 %v2144, %v2144
    %v2150 = vsel %vm1685, %v2149, 0.0
    %2151 = vadd.xlane.f32.xlu0 %v2150
    %v2152 = vpop.xlane.xlu0 %2151
    %v2153 = vmax.f32 %v2152, 1e-24
    %v2154 = vrsqrt.pop %v2153
    %v2155 = vmul.f32 %v2144, %v2154
    %v2156 = vmul.f32 %v1856, %v1856
    %v2157 = vsel %vm1685, %v2156, 0.0
    %2158 = vadd.xlane.f32.xlu0 %v2157
    %v2159 = vpop.xlane.xlu0 %2158
    %v2160 = vmax.f32 %v2159, 1e-24
    %v2161 = vrsqrt.pop %v2160
    %v2162 = vmul.f32 %v1856, %v2161
    %2163 = vmatprep.subr.mxu0 0.0
    %2164 = vmatpush1.xpose.msra.mxu0 %v2162
    %2165 = vmatprep.subr.mxu0 0.0
    %2166 = vmatpush1.xpose.msra.mxu0 0.0
    %2167 = vmatprep.subr.mxu0 0.0
    %2168 = vmatpush1.xpose.msra.mxu0 0.0
    %2169 = vmatprep.subr.mxu0 0.0
    %2170 = vmatpush1.xpose.msra.mxu0 0.0
    %2171 = vmatprep.subr.mxu0 0.0
    %2172 = vmatpush1.xpose.msra.mxu0 0.0
    %2173 = vmatprep.subr.mxu0 0.0
    %2174 = vmatpush1.xpose.msra.mxu0 0.0
    %2175 = vmatprep.subr.mxu0 0.0
    %2176 = vmatpush1.xpose.msra.mxu0 0.0
    %2177 = vmatprep.subr.mxu0 0.0
    %2178 = vmatpush1.xpose.msra.mxu0 0.0
    %2179 = vmatprep.subr.mxu0 0.0
    %2180 = vmatpush1.xpose.msra.mxu0 0.0
    %2181 = vmatprep.subr.mxu0 0.0
    %2182 = vmatpush1.xpose.msra.mxu0 0.0
    %2183 = vmatprep.subr.mxu0 0.0
    %2184 = vmatpush1.xpose.msra.mxu0 0.0
    %2185 = vmatprep.subr.mxu0 0.0
    %2186 = vmatpush1.xpose.msra.mxu0 0.0
    %2187 = vmatprep.subr.mxu0 0.0
    %2188 = vmatpush1.xpose.msra.mxu0 0.0
    %2189 = vmatprep.subr.mxu0 0.0
    %2190 = vmatpush1.xpose.msra.mxu0 0.0
    %2191 = vmatprep.subr.mxu0 0.0
    %2192 = vmatpush1.xpose.msra.mxu0 0.0
    %2193 = vmatprep.subr.mxu0 0.0
    %2194 = vmatpush1.xpose.msra.mxu0 0.0
    %2195 = vmatprep.subr.mxu0 0.0
    %2196 = vmatpush1.xpose.msra.mxu0 0.0
    %2197 = vmatprep.subr.mxu0 0.0
    %2198 = vmatpush1.xpose.msra.mxu0 0.0
    %2199 = vmatprep.subr.mxu0 0.0
    %2200 = vmatpush1.xpose.msra.mxu0 0.0
    %2201 = vmatprep.subr.mxu0 0.0
    %2202 = vmatpush1.xpose.msra.mxu0 0.0
    %2203 = vmatprep.subr.mxu0 0.0
    %2204 = vmatpush1.xpose.msra.mxu0 0.0
    %2205 = vmatprep.subr.mxu0 0.0
    %2206 = vmatpush1.xpose.msra.mxu0 0.0
    %2207 = vmatprep.subr.mxu0 0.0
    %2208 = vmatpush1.xpose.msra.mxu0 0.0
    %2209 = vmatprep.subr.mxu0 0.0
    %2210 = vmatpush1.xpose.msra.mxu0 0.0
    %2211 = vmatprep.subr.mxu0 0.0
    %2212 = vmatpush1.xpose.msra.mxu0 0.0
    %2213 = vmatprep.subr.mxu0 0.0
    %2214 = vmatpush1.xpose.msra.mxu0 0.0
    %2215 = vmatprep.subr.mxu0 0.0
    %2216 = vmatpush1.xpose.msra.mxu0 0.0
    %2217 = vmatprep.subr.mxu0 0.0
    %2218 = vmatpush1.xpose.msra.mxu0 0.0
    %2219 = vmatprep.subr.mxu0 0.0
    %2220 = vmatpush1.xpose.msra.mxu0 0.0
    %2221 = vmatprep.subr.mxu0 0.0
    %2222 = vmatpush1.xpose.msra.mxu0 0.0
    %2223 = vmatprep.subr.mxu0 0.0
    %2224 = vmatpush1.xpose.msra.mxu0 0.0
    %2225 = vmatprep.subr.mxu0 0.0
    %2226 = vmatpush1.xpose.msra.mxu0 0.0
    %2227 = vmatprep.mubr.f32.mxu0 0.0
    %2228 = vmatmul.mubr.f32.gmra.mrb[0].mxu0 %v2155
    %v2229 = vpop.f32.mrb[0].mxu0
    %v2230 = vadd.f32 0.0, %v2229
    %v2231 = vpop.f32.mrb[0].mxu0
    %2232 = vdwg.mxu0
    %v2233 = vlaneseq
    %v2234 = vand.u32 %v2233, 127
    %v2235 = vadd.s32 %v1679, 2
    %vm2236 = vcmp.lt.s32.totalorder %v2235, 0
    %v2237 = vsub.s32 0, %v2235
    %v2238 = vsel %vm2236, %v2237, %v2235
    %v2239 = vshrl.u32 %v2238, 2
    %v2240 = vand.u32 %v2238, 3
    %v2241 = vsub.s32 0, %v2240
    %v2242 = vsel %vm2236, %v2241, %v2240
    %vm2243 = vcmp.ne.s32.totalorder %v2242, 0
    %vm2244 = vcmp.lt.s32.totalorder %v2242, 0
    %vm2245 = vmand %vm2244, %vm2243
    %v2246 = vadd.s32 %v2242, 4
    %v2247 = vsel %vm2245, %v2246, %v2242
    %vm2248 = vcmp.eq.s32.totalorder %v2234, %v2247
    %v2249 = vsel %vm2248, %v2230, 0.0
    %vm2250 = vcmask 27648
    %v2251 = vsel %vm2250, %v2249, 0.0
    %2252 = vadd.xlane.f32.xlu0 %v2251
    %v2253 = vpop.xlane.xlu0 %2252
    %v2254 = vmul.f32 %v2253, 2.0
    %v2255 = vsub.f32 2.0, %v2254
    %v2256 = vsel %vm1685, %v2255, 0.0
    %v2257 = vrot.slane %v2256, 4
    %v2258 = vadd.f32 %v2256, %v2257
    %v2259 = vrot.slane %v2258, 2
    %v2260 = vadd.f32 %v2258, %v2259
    %v2261 = vrot.slane %v2260, 1
    %v2262 = vadd.f32 %v2260, %v2261
    %v2263 = vmul.f32 %v2262, 0.5
    %vm2264 = vcmask 0
    %2265 = vst.msk [vmem:[#allocation2] sm:$0x1] %vm2264, %v2263
    // Predicated region
    $region62: #{byol_forward.1} parent=1 // pred_check
      _
    $region63: #{byol_forward.1} parent=1 // pred_check_branch
      %2267 = sbr.rel (0) target = $region65
    $region64: #{byol_forward.1} parent=1 // pred_region
      %s2269 = ssub.s32 16, 16
      %2270 = vsyncadd [#allocation3], %s2269
      %s2272 = sshll.u32 [#allocation2], 4
      %s2273 = int_to_ptr.vmem [resolvable:$true] %s2272
      %2275 = dma.vmem_to_hbm [thread:$0]  %s2273, 16, %s15, [#allocation3]
    $region65: #{byol_forward.1} parent=1 // pred_fallthru
      _
    // Predicated region
    $region66: #{byol_forward.1} parent=1 // pred_check
      _
    $region67: #{byol_forward.1} parent=1 // pred_check_branch
      %2277 = sbr.rel (0) target = $region69
    $region68: #{byol_forward.1} parent=1 // pred_region
      %2278 = dma.done [#allocation3], 16
    $region69: #{byol_forward.1} parent=1 // pred_fallthru
      _
    %2279 = vsyncpa [#allocation3], 1

</llo_original>
